<compile_context>
chip_gen: v6e
topology: v6e:2x2x1
jax: 0.10.0
libtpu: 0.0.40
codegen_flags: <defaults>
</compile_context>

<pallas_src>
import functools

import jax
import jax.numpy as jnp
import numpy as np
from jax import lax
from jax.experimental import pallas as pl
from jax.experimental.pallas import tpu as pltpu


def ssp_kernel(x_ref, wc_ref, wt_ref, g_ref, bias_ref, o_ref, xpad_ref,
               *, H, W, C, PAD_Y, PAD_X, tap_offsets):
    """Fused SSP forward for one batch element.

    x_ref    : (1, H, W*C)     input image, channels innermost on the lane dim
    wc_ref   : (W*C, W*C)      block-diag folded weight of the centre tap
                               (1x1 branch + centre taps of all dilated convs)
    wt_ref   : (T, W*C, W*C)   block-diag folded weights of surviving
                               off-centre taps (dummy (1,...) if T == 0)
    g_ref    : (W*C, W*C)      GAP operator  kron(ones(W,W), wm_eff) / (H*W)
    bias_ref : (1, W*C)        folded bias, tiled across the W lane blocks
    o_ref    : (1, H, W*C)     output
    xpad_ref : (H+2*PAD_Y, (W+2*PAD_X)*C)  VMEM halo scratch (zero padded)
    """
    WC = W * C
    x2d = x_ref[0]                                              # (H, W*C)

    # ---- centre tap: a single matmul covers the 1x1 branch and the centre
    #      taps of all three dilated branches (weights folded in the wrapper).
    acc = jnp.dot(x2d, wc_ref[...], preferred_element_type=jnp.float32)

    # ---- global-average-pool branch (kept in f32).  colsum @ G yields the
    #      per-channel GAP output already tiled across the W*C lane blocks
    #      (bilinear upsample of a 1x1 map is a spatial constant).
    colsum = jnp.sum(x2d.astype(jnp.float32), axis=0, keepdims=True)   # (1, W*C)
    gap = jnp.dot(colsum, g_ref[...], preferred_element_type=jnp.float32)

    acc = acc + gap + bias_ref[...]                             # broadcast over H

    # ---- off-centre dilated-conv taps: build the zero halo in VMEM once per
    #      grid step, then every tap is a pure 2-D static slice + one matmul.
    if tap_offsets:
        xpad_ref[...] = jnp.zeros(xpad_ref.shape, xpad_ref.dtype)
        xpad_ref[PAD_Y:PAD_Y + H, PAD_X * C:PAD_X * C + WC] = x2d
        for t, (dy, dx) in enumerate(tap_offsets):
            ys = PAD_Y + dy                                     # static ints
            xs = (PAD_X + dx) * C
            patch = xpad_ref[ys:ys + H, xs:xs + WC]             # (H, W*C)
            acc = acc + jnp.dot(patch, wt_ref[t],
                                preferred_element_type=jnp.float32)

    o_ref[0] = acc.astype(o_ref.dtype)


def ssp_pallas(x_nhwc, params, *, compute_dtype=jnp.float32):
    """x_nhwc: (B, H, W, C) float32. Returns (B, H, W, C) float32."""
    (wm, bm, w1, b1, w6, b6, w12, b12, w18, b18, wo, bo) = params
    B, H, W, C = x_nhwc.shape
    WC = W * C

    # ---- fold the final 1x1 conv (wo, bo) into every branch ----------------
    wo0, wo1, wo2, wo3, wo4 = (wo[i * C:(i + 1) * C] for i in range(5))
    wm_eff = wm @ wo0                                                    # GAP
    bias_eff = bo + bm @ wo0 + b1 @ wo1 + b6 @ wo2 + b12 @ wo3 + b18 @ wo4
    # 1x1 branch + the three dilated-conv centre taps share the same pixels.
    w_center = w1 @ wo1 + w6[1, 1] @ wo2 + w12[1, 1] @ wo3 + w18[1, 1] @ wo4

    # ---- surviving off-centre taps (skip taps that read only zero padding) --
    taps = []
    for d, w3, wox in ((6, w6, wo2), (12, w12, wo3), (18, w18, wo4)):
        for ky in range(3):
            for kx in range(3):
                if ky == 1 and kx == 1:
                    continue
                dy, dx = (ky - 1) * d, (kx - 1) * d
                if abs(dy) >= H or abs(dx) >= W:
                    continue          # whole tap lands in the zero padding
                taps.append((dy, dx, w3[ky, kx] @ wox))
    tap_offsets = tuple((dy, dx) for dy, dx, _ in taps)
    pad_y = max((abs(dy) for dy, _, _ in taps), default=0)
    pad_x = max((abs(dx) for _, dx, _ in taps), default=0)

    # ---- lift each per-tap (C, C) weight to a block-diagonal (W*C, W*C) so a
    #      single (H, W*C) x (W*C, W*C) matmul applies it to every column ------
    eye_w = jnp.eye(W, dtype=jnp.float32)
    wc_bd = jnp.kron(eye_w, w_center).astype(compute_dtype)
    if taps:
        wt_bd = jnp.stack([jnp.kron(eye_w, w) for _, _, w in taps])
        wt_bd = wt_bd.astype(compute_dtype)
    else:
        wt_bd = jnp.zeros((1, WC, WC), compute_dtype)            # unused dummy
    gap_op = jnp.kron(jnp.ones((W, W), jnp.float32), wm_eff) / (H * W)   # f32
    bias_lane = jnp.tile(bias_eff, (1, W)).astype(jnp.float32)           # (1, W*C)

    x_flat = x_nhwc.reshape(B, H, WC).astype(compute_dtype)      # free reshape

    kernel = functools.partial(ssp_kernel, H=H, W=W, C=C,
                               PAD_Y=pad_y, PAD_X=pad_x,
                               tap_offsets=tap_offsets)

    grid_spec = pltpu.PrefetchScalarGridSpec(
        num_scalar_prefetch=0,
        grid=(B,),
        in_specs=[
            pl.BlockSpec((1, H, WC), lambda b: (b, 0, 0)),
            # Constant index maps: these could be single-buffered via
            # pipeline_mode=pl.Buffered(1) on builds that honour it.
            pl.BlockSpec(wc_bd.shape, lambda b: (0, 0)),
            pl.BlockSpec(wt_bd.shape, lambda b: (0, 0, 0)),
            pl.BlockSpec(gap_op.shape, lambda b: (0, 0)),
            pl.BlockSpec(bias_lane.shape, lambda b: (0, 0)),
        ],
        out_specs=pl.BlockSpec((1, H, WC), lambda b: (b, 0, 0)),
        scratch_shapes=[
            pltpu.VMEM((H + 2 * pad_y, (W + 2 * pad_x) * C), compute_dtype),
        ],
    )

    out_flat = pl.pallas_call(
        kernel,
        out_shape=jax.ShapeDtypeStruct((B, H, WC), jnp.float32),
        grid_spec=grid_spec,
        compiler_params=pltpu.CompilerParams(
            # batch elements are independent -> shard across v7x's 2 TCs
            dimension_semantics=("parallel",),
            vmem_limit_bytes=32 * 1024 * 1024,
        ),
    )(x_flat, wc_bd, wt_bd, gap_op, bias_lane)

    return out_flat.reshape(B, H, W, C)


def ssp_reference(x, params):
    """Plain-JAX NHWC reference matching the PyTorch forward semantics."""
    (wm, bm, w1, b1, w6, b6, w12, b12, w18, b18, wo, bo) = params
    B, H, W, C = x.shape
    m = jnp.mean(x, axis=(1, 2), keepdims=True)                        # (B,1,1,C)
    feat0 = jnp.einsum('bijc,cd->bijd', m, wm) + bm                    # (B,1,1,C)
    feat0 = jnp.broadcast_to(feat0, (B, H, W, C))   # bilinear upsample of 1x1 = const
    a1 = jnp.einsum('bhwc,cd->bhwd', x, w1) + b1

    def dil(w, b, d):
        y = lax.conv_general_dilated(
            x, w, window_strides=(1, 1), padding=[(d, d), (d, d)],
            rhs_dilation=(d, d),
            dimension_numbers=('NHWC', 'HWIO', 'NHWC'))
        return y + b

    a6, a12, a18 = dil(w6, b6, 6), dil(w12, b12, 12), dil(w18, b18, 18)
    cat = jnp.concatenate([feat0, a1, a6, a12, a18], axis=-1)
    return jnp.einsum('bhwc,cd->bhwd', cat, wo) + bo


def make_params(key, C):
    """Deterministic synthetic parameters (PyTorch Conv2d equivalents stored in
    matmul-friendly layouts: 1x1 -> (Cin, Cout), 3x3 -> HWIO (3,3,Cin,Cout))."""
    ks = jax.random.split(key, 12)
    s = 0.2
    wm  = s * jax.random.normal(ks[0], (C, C), jnp.float32)
    bm  = s * jax.random.normal(ks[1], (1, C), jnp.float32)
    w1  = s * jax.random.normal(ks[2], (C, C), jnp.float32)
    b1  = s * jax.random.normal(ks[3], (1, C), jnp.float32)
    w6  = s * jax.random.normal(ks[4], (3, 3, C, C), jnp.float32)
    b6  = s * jax.random.normal(ks[5], (1, C), jnp.float32)
    w12 = s * jax.random.normal(ks[6], (3, 3, C, C), jnp.float32)
    b12 = s * jax.random.normal(ks[7], (1, C), jnp.float32)
    w18 = s * jax.random.normal(ks[8], (3, 3, C, C), jnp.float32)
    b18 = s * jax.random.normal(ks[9], (1, C), jnp.float32)
    wo  = s * jax.random.normal(ks[10], (5 * C, C), jnp.float32)
    bo  = s * jax.random.normal(ks[11], (1, C), jnp.float32)
    return (wm, bm, w1, b1, w6, b6, w12, b12, w18, b18, wo, bo)


if __name__ == "__main__":
    key = jax.random.PRNGKey(0)
    kx, kp = jax.random.split(key)

    B, C, H, W = 2, 4, 16, 16
    x_nchw = jax.random.normal(kx, (B, C, H, W), jnp.float32)   # PyTorch-style input
    x_nhwc = jnp.transpose(x_nchw, (0, 2, 3, 1))                # kernel layout

    params = make_params(kp, C)
    ref = jax.block_until_ready(ssp_reference(x_nhwc, params))

    # f32 compute path: tight check against the reference.
    out = jax.block_until_ready(ssp_pallas(x_nhwc, params))
    assert out.shape == (B, H, W, C)
    np.testing.assert_allclose(np.asarray(out), np.asarray(ref),
                               rtol=1e-4, atol=1e-4)

    # bf16 compute path (review: bf16 MXU + halved DMA/VMEM); looser tolerance.
    out_bf16 = jax.block_until_ready(
        ssp_pallas(x_nhwc, params, compute_dtype=jnp.bfloat16))
    np.testing.assert_allclose(np.asarray(out_bf16), np.asarray(ref),
                               rtol=3e-2, atol=3e-2)

    print("KERNEL_OK")
</pallas_src>

<mosaic_0001>
module attributes {stable_mosaic.version = 11 : i64} {
  func.func @ssp_kernel(%arg0: i32, %arg1: memref<1x16x64xf32, #tpu.memory_space<vmem>>, %arg2: memref<64x64xf32, #tpu.memory_space<vmem>>, %arg3: memref<16x64x64xf32, #tpu.memory_space<vmem>>, %arg4: memref<64x64xf32, #tpu.memory_space<vmem>>, %arg5: memref<1x64xf32, #tpu.memory_space<vmem>>, %arg6: memref<1x16x64xf32, #tpu.memory_space<vmem>>, %arg7: memref<40x160xf32, #tpu.memory_space<vmem>>) attributes {dimension_semantics = [#tpu.dimension_semantics<parallel>], iteration_bounds = array<i64: 2>, scalar_prefetch = 0 : i64, scratch_operands = 1 : i64, tpu.core_type = #tpu.core_type<tc>, window_params = [{transform_indices = @transform_0, window_bounds = array<i64: 1, 16, 64>}, {pipeline_mode = #tpu.pipeline_mode<synchronous>, transform_indices = @transform_1, window_bounds = array<i64: 64, 64>}, {pipeline_mode = #tpu.pipeline_mode<synchronous>, transform_indices = @transform_2, window_bounds = array<i64: 16, 64, 64>}, {pipeline_mode = #tpu.pipeline_mode<synchronous>, transform_indices = @transform_3, window_bounds = array<i64: 64, 64>}, {pipeline_mode = #tpu.pipeline_mode<synchronous>, transform_indices = @transform_4, window_bounds = array<i64: 1, 64>}, {transform_indices = @transform_5, window_bounds = array<i64: 1, 16, 64>}]} {
    %c0 = arith.constant 0 : index
    %c0_0 = arith.constant 0 : index
    %c0_1 = arith.constant 0 : index
    %0 = vector.load %arg1[%c0, %c0_0, %c0_1] : memref<1x16x64xf32, #tpu.memory_space<vmem>>, vector<1x16x64xf32>
    %1 = vector.shape_cast %0 : vector<1x16x64xf32> to vector<16x64xf32>
    %c0_2 = arith.constant 0 : index
    %c0_3 = arith.constant 0 : index
    %2 = vector.load %arg2[%c0_2, %c0_3] : memref<64x64xf32, #tpu.memory_space<vmem>>, vector<64x64xf32>
    %cst = arith.constant dense<0.000000e+00> : vector<16x64xf32>
    %3 = tpu.matmul %1, %2, %cst {dimension_numbers = #tpu.dot_dimension_numbers<[1], [0], [0], [1], [0, 0, 1, 1], [], []>} : vector<16x64xf32>, vector<64x64xf32>, vector<16x64xf32> -> vector<16x64xf32>
    %cst_4 = arith.constant dense<0.000000e+00> : vector<64xf32>
    %4 = vector.multi_reduction <add>, %1, %cst_4 [0] : vector<16x64xf32> to vector<64xf32>
    %5 = vector.shape_cast %4 : vector<64xf32> to vector<1x64xf32>
    %c0_5 = arith.constant 0 : index
    %c0_6 = arith.constant 0 : index
    %6 = vector.load %arg4[%c0_5, %c0_6] : memref<64x64xf32, #tpu.memory_space<vmem>>, vector<64x64xf32>
    %cst_7 = arith.constant dense<0.000000e+00> : vector<1x64xf32>
    %7 = tpu.matmul %5, %6, %cst_7 {dimension_numbers = #tpu.dot_dimension_numbers<[1], [0], [0], [1], [0, 0, 1, 1], [], []>} : vector<1x64xf32>, vector<64x64xf32>, vector<1x64xf32> -> vector<1x64xf32>
    %8 = vector.broadcast %7 : vector<1x64xf32> to vector<16x64xf32>
    %9 = arith.addf %3, %8 : vector<16x64xf32>
    %c0_8 = arith.constant 0 : index
    %c0_9 = arith.constant 0 : index
    %10 = vector.load %arg5[%c0_8, %c0_9] : memref<1x64xf32, #tpu.memory_space<vmem>>, vector<1x64xf32>
    %11 = vector.broadcast %10 : vector<1x64xf32> to vector<16x64xf32>
    %12 = arith.addf %9, %11 : vector<16x64xf32>
    %cst_10 = arith.constant 0.000000e+00 : f32
    %13 = vector.broadcast %cst_10 : f32 to vector<40x160xf32>
    %c0_11 = arith.constant 0 : index
    %c0_12 = arith.constant 0 : index
    %14 = vector.load %arg7[%c0_11, %c0_12] : memref<40x160xf32, #tpu.memory_space<vmem>>, vector<40x160xf32>
    tpu.vector_store %arg7[%c0_11, %c0_12], %13 {strides = array<i32>} : memref<40x160xf32, #tpu.memory_space<vmem>>, vector<40x160xf32>,
    %c12 = arith.constant 12 : index
    %c48 = arith.constant 48 : index
    %15 = vector.load %arg7[%c12, %c48] : memref<40x160xf32, #tpu.memory_space<vmem>>, vector<16x64xf32>
    tpu.vector_store %arg7[%c12, %c48], %1 {strides = array<i32>} : memref<40x160xf32, #tpu.memory_space<vmem>>, vector<16x64xf32>,
    %c6 = arith.constant 6 : index
    %c24 = arith.constant 24 : index
    %16 = vector.load %arg7[%c6, %c24] : memref<40x160xf32, #tpu.memory_space<vmem>>, vector<16x64xf32>
    %c0_13 = arith.constant 0 : index
    %c0_14 = arith.constant 0 : index
    %c0_15 = arith.constant 0 : index
    %17 = vector.load %arg3[%c0_13, %c0_14, %c0_15] : memref<16x64x64xf32, #tpu.memory_space<vmem>>, vector<1x64x64xf32>
    %18 = vector.shape_cast %17 : vector<1x64x64xf32> to vector<64x64xf32>
    %cst_16 = arith.constant dense<0.000000e+00> : vector<16x64xf32>
    %19 = tpu.matmul %16, %18, %cst_16 {dimension_numbers = #tpu.dot_dimension_numbers<[1], [0], [0], [1], [0, 0, 1, 1], [], []>} : vector<16x64xf32>, vector<64x64xf32>, vector<16x64xf32> -> vector<16x64xf32>
    %20 = arith.addf %12, %19 : vector<16x64xf32>
    %c6_17 = arith.constant 6 : index
    %c48_18 = arith.constant 48 : index
    %21 = vector.load %arg7[%c6_17, %c48_18] : memref<40x160xf32, #tpu.memory_space<vmem>>, vector<16x64xf32>
    %c1 = arith.constant 1 : index
    %c0_19 = arith.constant 0 : index
    %c0_20 = arith.constant 0 : index
    %22 = vector.load %arg3[%c1, %c0_19, %c0_20] : memref<16x64x64xf32, #tpu.memory_space<vmem>>, vector<1x64x64xf32>
    %23 = vector.shape_cast %22 : vector<1x64x64xf32> to vector<64x64xf32>
    %cst_21 = arith.constant dense<0.000000e+00> : vector<16x64xf32>
    %24 = tpu.matmul %21, %23, %cst_21 {dimension_numbers = #tpu.dot_dimension_numbers<[1], [0], [0], [1], [0, 0, 1, 1], [], []>} : vector<16x64xf32>, vector<64x64xf32>, vector<16x64xf32> -> vector<16x64xf32>
    %25 = arith.addf %20, %24 : vector<16x64xf32>
    %c6_22 = arith.constant 6 : index
    %c72 = arith.constant 72 : index
    %26 = vector.load %arg7[%c6_22, %c72] : memref<40x160xf32, #tpu.memory_space<vmem>>, vector<16x64xf32>
    %c2 = arith.constant 2 : index
    %c0_23 = arith.constant 0 : index
    %c0_24 = arith.constant 0 : index
    %27 = vector.load %arg3[%c2, %c0_23, %c0_24] : memref<16x64x64xf32, #tpu.memory_space<vmem>>, vector<1x64x64xf32>
    %28 = vector.shape_cast %27 : vector<1x64x64xf32> to vector<64x64xf32>
    %cst_25 = arith.constant dense<0.000000e+00> : vector<16x64xf32>
    %29 = tpu.matmul %26, %28, %cst_25 {dimension_numbers = #tpu.dot_dimension_numbers<[1], [0], [0], [1], [0, 0, 1, 1], [], []>} : vector<16x64xf32>, vector<64x64xf32>, vector<16x64xf32> -> vector<16x64xf32>
    %30 = arith.addf %25, %29 : vector<16x64xf32>
    %c12_26 = arith.constant 12 : index
    %c24_27 = arith.constant 24 : index
    %31 = vector.load %arg7[%c12_26, %c24_27] : memref<40x160xf32, #tpu.memory_space<vmem>>, vector<16x64xf32>
    %c3 = arith.constant 3 : index
    %c0_28 = arith.constant 0 : index
    %c0_29 = arith.constant 0 : index
    %32 = vector.load %arg3[%c3, %c0_28, %c0_29] : memref<16x64x64xf32, #tpu.memory_space<vmem>>, vector<1x64x64xf32>
    %33 = vector.shape_cast %32 : vector<1x64x64xf32> to vector<64x64xf32>
    %cst_30 = arith.constant dense<0.000000e+00> : vector<16x64xf32>
    %34 = tpu.matmul %31, %33, %cst_30 {dimension_numbers = #tpu.dot_dimension_numbers<[1], [0], [0], [1], [0, 0, 1, 1], [], []>} : vector<16x64xf32>, vector<64x64xf32>, vector<16x64xf32> -> vector<16x64xf32>
    %35 = arith.addf %30, %34 : vector<16x64xf32>
    %c12_31 = arith.constant 12 : index
    %c72_32 = arith.constant 72 : index
    %36 = vector.load %arg7[%c12_31, %c72_32] : memref<40x160xf32, #tpu.memory_space<vmem>>, vector<16x64xf32>
    %c4 = arith.constant 4 : index
    %c0_33 = arith.constant 0 : index
    %c0_34 = arith.constant 0 : index
    %37 = vector.load %arg3[%c4, %c0_33, %c0_34] : memref<16x64x64xf32, #tpu.memory_space<vmem>>, vector<1x64x64xf32>
    %38 = vector.shape_cast %37 : vector<1x64x64xf32> to vector<64x64xf32>
    %cst_35 = arith.constant dense<0.000000e+00> : vector<16x64xf32>
    %39 = tpu.matmul %36, %38, %cst_35 {dimension_numbers = #tpu.dot_dimension_numbers<[1], [0], [0], [1], [0, 0, 1, 1], [], []>} : vector<16x64xf32>, vector<64x64xf32>, vector<16x64xf32> -> vector<16x64xf32>
    %40 = arith.addf %35, %39 : vector<16x64xf32>
    %c18 = arith.constant 18 : index
    %c24_36 = arith.constant 24 : index
    %41 = vector.load %arg7[%c18, %c24_36] : memref<40x160xf32, #tpu.memory_space<vmem>>, vector<16x64xf32>
    %c5 = arith.constant 5 : index
    %c0_37 = arith.constant 0 : index
    %c0_38 = arith.constant 0 : index
    %42 = vector.load %arg3[%c5, %c0_37, %c0_38] : memref<16x64x64xf32, #tpu.memory_space<vmem>>, vector<1x64x64xf32>
    %43 = vector.shape_cast %42 : vector<1x64x64xf32> to vector<64x64xf32>
    %cst_39 = arith.constant dense<0.000000e+00> : vector<16x64xf32>
    %44 = tpu.matmul %41, %43, %cst_39 {dimension_numbers = #tpu.dot_dimension_numbers<[1], [0], [0], [1], [0, 0, 1, 1], [], []>} : vector<16x64xf32>, vector<64x64xf32>, vector<16x64xf32> -> vector<16x64xf32>
    %45 = arith.addf %40, %44 : vector<16x64xf32>
    %c18_40 = arith.constant 18 : index
    %c48_41 = arith.constant 48 : index
    %46 = vector.load %arg7[%c18_40, %c48_41] : memref<40x160xf32, #tpu.memory_space<vmem>>, vector<16x64xf32>
    %c6_42 = arith.constant 6 : index
    %c0_43 = arith.constant 0 : index
    %c0_44 = arith.constant 0 : index
    %47 = vector.load %arg3[%c6_42, %c0_43, %c0_44] : memref<16x64x64xf32, #tpu.memory_space<vmem>>, vector<1x64x64xf32>
    %48 = vector.shape_cast %47 : vector<1x64x64xf32> to vector<64x64xf32>
    %cst_45 = arith.constant dense<0.000000e+00> : vector<16x64xf32>
    %49 = tpu.matmul %46, %48, %cst_45 {dimension_numbers = #tpu.dot_dimension_numbers<[1], [0], [0], [1], [0, 0, 1, 1], [], []>} : vector<16x64xf32>, vector<64x64xf32>, vector<16x64xf32> -> vector<16x64xf32>
    %50 = arith.addf %45, %49 : vector<16x64xf32>
    %c18_46 = arith.constant 18 : index
    %c72_47 = arith.constant 72 : index
    %51 = vector.load %arg7[%c18_46, %c72_47] : memref<40x160xf32, #tpu.memory_space<vmem>>, vector<16x64xf32>
    %c7 = arith.constant 7 : index
    %c0_48 = arith.constant 0 : index
    %c0_49 = arith.constant 0 : index
    %52 = vector.load %arg3[%c7, %c0_48, %c0_49] : memref<16x64x64xf32, #tpu.memory_space<vmem>>, vector<1x64x64xf32>
    %53 = vector.shape_cast %52 : vector<1x64x64xf32> to vector<64x64xf32>
    %cst_50 = arith.constant dense<0.000000e+00> : vector<16x64xf32>
    %54 = tpu.matmul %51, %53, %cst_50 {dimension_numbers = #tpu.dot_dimension_numbers<[1], [0], [0], [1], [0, 0, 1, 1], [], []>} : vector<16x64xf32>, vector<64x64xf32>, vector<16x64xf32> -> vector<16x64xf32>
    %55 = arith.addf %50, %54 : vector<16x64xf32>
    %c0_51 = arith.constant 0 : index
    %c0_52 = arith.constant 0 : index
    %56 = vector.load %arg7[%c0_51, %c0_52] : memref<40x160xf32, #tpu.memory_space<vmem>>, vector<16x64xf32>
    %c8 = arith.constant 8 : index
    %c0_53 = arith.constant 0 : index
    %c0_54 = arith.constant 0 : index
    %57 = vector.load %arg3[%c8, %c0_53, %c0_54] : memref<16x64x64xf32, #tpu.memory_space<vmem>>, vector<1x64x64xf32>
    %58 = vector.shape_cast %57 : vector<1x64x64xf32> to vector<64x64xf32>
    %cst_55 = arith.constant dense<0.000000e+00> : vector<16x64xf32>
    %59 = tpu.matmul %56, %58, %cst_55 {dimension_numbers = #tpu.dot_dimension_numbers<[1], [0], [0], [1], [0, 0, 1, 1], [], []>} : vector<16x64xf32>, vector<64x64xf32>, vector<16x64xf32> -> vector<16x64xf32>
    %60 = arith.addf %55, %59 : vector<16x64xf32>
    %c0_56 = arith.constant 0 : index
    %c48_57 = arith.constant 48 : index
    %61 = vector.load %arg7[%c0_56, %c48_57] : memref<40x160xf32, #tpu.memory_space<vmem>>, vector<16x64xf32>
    %c9 = arith.constant 9 : index
    %c0_58 = arith.constant 0 : index
    %c0_59 = arith.constant 0 : index
    %62 = vector.load %arg3[%c9, %c0_58, %c0_59] : memref<16x64x64xf32, #tpu.memory_space<vmem>>, vector<1x64x64xf32>
    %63 = vector.shape_cast %62 : vector<1x64x64xf32> to vector<64x64xf32>
    %cst_60 = arith.constant dense<0.000000e+00> : vector<16x64xf32>
    %64 = tpu.matmul %61, %63, %cst_60 {dimension_numbers = #tpu.dot_dimension_numbers<[1], [0], [0], [1], [0, 0, 1, 1], [], []>} : vector<16x64xf32>, vector<64x64xf32>, vector<16x64xf32> -> vector<16x64xf32>
    %65 = arith.addf %60, %64 : vector<16x64xf32>
    %c0_61 = arith.constant 0 : index
    %c96 = arith.constant 96 : index
    %66 = vector.load %arg7[%c0_61, %c96] : memref<40x160xf32, #tpu.memory_space<vmem>>, vector<16x64xf32>
    %c10 = arith.constant 10 : index
    %c0_62 = arith.constant 0 : index
    %c0_63 = arith.constant 0 : index
    %67 = vector.load %arg3[%c10, %c0_62, %c0_63] : memref<16x64x64xf32, #tpu.memory_space<vmem>>, vector<1x64x64xf32>
    %68 = vector.shape_cast %67 : vector<1x64x64xf32> to vector<64x64xf32>
    %cst_64 = arith.constant dense<0.000000e+00> : vector<16x64xf32>
    %69 = tpu.matmul %66, %68, %cst_64 {dimension_numbers = #tpu.dot_dimension_numbers<[1], [0], [0], [1], [0, 0, 1, 1], [], []>} : vector<16x64xf32>, vector<64x64xf32>, vector<16x64xf32> -> vector<16x64xf32>
    %70 = arith.addf %65, %69 : vector<16x64xf32>
    %c12_65 = arith.constant 12 : index
    %c0_66 = arith.constant 0 : index
    %71 = vector.load %arg7[%c12_65, %c0_66] : memref<40x160xf32, #tpu.memory_space<vmem>>, vector<16x64xf32>
    %c11 = arith.constant 11 : index
    %c0_67 = arith.constant 0 : index
    %c0_68 = arith.constant 0 : index
    %72 = vector.load %arg3[%c11, %c0_67, %c0_68] : memref<16x64x64xf32, #tpu.memory_space<vmem>>, vector<1x64x64xf32>
    %73 = vector.shape_cast %72 : vector<1x64x64xf32> to vector<64x64xf32>
    %cst_69 = arith.constant dense<0.000000e+00> : vector<16x64xf32>
    %74 = tpu.matmul %71, %73, %cst_69 {dimension_numbers = #tpu.dot_dimension_numbers<[1], [0], [0], [1], [0, 0, 1, 1], [], []>} : vector<16x64xf32>, vector<64x64xf32>, vector<16x64xf32> -> vector<16x64xf32>
    %75 = arith.addf %70, %74 : vector<16x64xf32>
    %c12_70 = arith.constant 12 : index
    %c96_71 = arith.constant 96 : index
    %76 = vector.load %arg7[%c12_70, %c96_71] : memref<40x160xf32, #tpu.memory_space<vmem>>, vector<16x64xf32>
    %c12_72 = arith.constant 12 : index
    %c0_73 = arith.constant 0 : index
    %c0_74 = arith.constant 0 : index
    %77 = vector.load %arg3[%c12_72, %c0_73, %c0_74] : memref<16x64x64xf32, #tpu.memory_space<vmem>>, vector<1x64x64xf32>
    %78 = vector.shape_cast %77 : vector<1x64x64xf32> to vector<64x64xf32>
    %cst_75 = arith.constant dense<0.000000e+00> : vector<16x64xf32>
    %79 = tpu.matmul %76, %78, %cst_75 {dimension_numbers = #tpu.dot_dimension_numbers<[1], [0], [0], [1], [0, 0, 1, 1], [], []>} : vector<16x64xf32>, vector<64x64xf32>, vector<16x64xf32> -> vector<16x64xf32>
    %80 = arith.addf %75, %79 : vector<16x64xf32>
    %c24_76 = arith.constant 24 : index
    %c0_77 = arith.constant 0 : index
    %81 = vector.load %arg7[%c24_76, %c0_77] : memref<40x160xf32, #tpu.memory_space<vmem>>, vector<16x64xf32>
    %c13 = arith.constant 13 : index
    %c0_78 = arith.constant 0 : index
    %c0_79 = arith.constant 0 : index
    %82 = vector.load %arg3[%c13, %c0_78, %c0_79] : memref<16x64x64xf32, #tpu.memory_space<vmem>>, vector<1x64x64xf32>
    %83 = vector.shape_cast %82 : vector<1x64x64xf32> to vector<64x64xf32>
    %cst_80 = arith.constant dense<0.000000e+00> : vector<16x64xf32>
    %84 = tpu.matmul %81, %83, %cst_80 {dimension_numbers = #tpu.dot_dimension_numbers<[1], [0], [0], [1], [0, 0, 1, 1], [], []>} : vector<16x64xf32>, vector<64x64xf32>, vector<16x64xf32> -> vector<16x64xf32>
    %85 = arith.addf %80, %84 : vector<16x64xf32>
    %c24_81 = arith.constant 24 : index
    %c48_82 = arith.constant 48 : index
    %86 = vector.load %arg7[%c24_81, %c48_82] : memref<40x160xf32, #tpu.memory_space<vmem>>, vector<16x64xf32>
    %c14 = arith.constant 14 : index
    %c0_83 = arith.constant 0 : index
    %c0_84 = arith.constant 0 : index
    %87 = vector.load %arg3[%c14, %c0_83, %c0_84] : memref<16x64x64xf32, #tpu.memory_space<vmem>>, vector<1x64x64xf32>
    %88 = vector.shape_cast %87 : vector<1x64x64xf32> to vector<64x64xf32>
    %cst_85 = arith.constant dense<0.000000e+00> : vector<16x64xf32>
    %89 = tpu.matmul %86, %88, %cst_85 {dimension_numbers = #tpu.dot_dimension_numbers<[1], [0], [0], [1], [0, 0, 1, 1], [], []>} : vector<16x64xf32>, vector<64x64xf32>, vector<16x64xf32> -> vector<16x64xf32>
    %90 = arith.addf %85, %89 : vector<16x64xf32>
    %c24_86 = arith.constant 24 : index
    %c96_87 = arith.constant 96 : index
    %91 = vector.load %arg7[%c24_86, %c96_87] : memref<40x160xf32, #tpu.memory_space<vmem>>, vector<16x64xf32>
    %c15 = arith.constant 15 : index
    %c0_88 = arith.constant 0 : index
    %c0_89 = arith.constant 0 : index
    %92 = vector.load %arg3[%c15, %c0_88, %c0_89] : memref<16x64x64xf32, #tpu.memory_space<vmem>>, vector<1x64x64xf32>
    %93 = vector.shape_cast %92 : vector<1x64x64xf32> to vector<64x64xf32>
    %cst_90 = arith.constant dense<0.000000e+00> : vector<16x64xf32>
    %94 = tpu.matmul %91, %93, %cst_90 {dimension_numbers = #tpu.dot_dimension_numbers<[1], [0], [0], [1], [0, 0, 1, 1], [], []>} : vector<16x64xf32>, vector<64x64xf32>, vector<16x64xf32> -> vector<16x64xf32>
    %95 = arith.addf %90, %94 : vector<16x64xf32>
    %c0_91 = arith.constant 0 : index
    %c0_92 = arith.constant 0 : index
    %c0_93 = arith.constant 0 : index
    %96 = vector.load %arg6[%c0_91, %c0_92, %c0_93] : memref<1x16x64xf32, #tpu.memory_space<vmem>>, vector<1x16x64xf32>
    %97 = vector.shape_cast %96 : vector<1x16x64xf32> to vector<16x64xf32>
    %98 = vector.shape_cast %95 : vector<16x64xf32> to vector<1x16x64xf32>
    tpu.vector_store %arg6[%c0_91, %c0_92, %c0_93], %98 {strides = array<i32>} : memref<1x16x64xf32, #tpu.memory_space<vmem>>, vector<1x16x64xf32>,
    return
  }
  func.func @transform_0(%arg0: i32) -> (i32, i32, i32) {
    %c0_i32 = arith.constant 0 : i32
    %c0_i32_0 = arith.constant 0 : i32
    %c0_i32_1 = arith.constant 0 : i32
    return %arg0, %c0_i32, %c0_i32_0 : i32, i32, i32
  }
  func.func @transform_1(%arg0: i32) -> (i32, i32) {
    %c0_i32 = arith.constant 0 : i32
    %c0_i32_0 = arith.constant 0 : i32
    %c0_i32_1 = arith.constant 0 : i32
    return %c0_i32, %c0_i32_0 : i32, i32
  }
  func.func @transform_2(%arg0: i32) -> (i32, i32, i32) {
    %c0_i32 = arith.constant 0 : i32
    %c0_i32_0 = arith.constant 0 : i32
    %c0_i32_1 = arith.constant 0 : i32
    %c0_i32_2 = arith.constant 0 : i32
    return %c0_i32, %c0_i32_0, %c0_i32_1 : i32, i32, i32
  }
  func.func @transform_3(%arg0: i32) -> (i32, i32) {
    %c0_i32 = arith.constant 0 : i32
    %c0_i32_0 = arith.constant 0 : i32
    %c0_i32_1 = arith.constant 0 : i32
    return %c0_i32, %c0_i32_0 : i32, i32
  }
  func.func @transform_4(%arg0: i32) -> (i32, i32) {
    %c0_i32 = arith.constant 0 : i32
    %c0_i32_0 = arith.constant 0 : i32
    %c0_i32_1 = arith.constant 0 : i32
    return %c0_i32, %c0_i32_0 : i32, i32
  }
  func.func @transform_5(%arg0: i32) -> (i32, i32, i32) {
    %c0_i32 = arith.constant 0 : i32
    %c0_i32_0 = arith.constant 0 : i32
    %c0_i32_1 = arith.constant 0 : i32
    return %arg0, %c0_i32, %c0_i32_0 : i32, i32, i32
  }
}

</mosaic_0001>

<llo_original>
// kernel: tpu_custom_call.1
$region0: #{tpu_custom_call.1}
  #allocation0 [shape = 'u32[]', space=smem, size = 0x4, offset = 0x4, fixed_abs, tag = 'smem constant byte address 0x4 - core index']
  #allocation1 [shape = 'u32[144,128]{1,0:T(1,128)}', space=vmem, size = 0x12000, scoped, tag = 'internal scratch']
  #allocation2 [shape = 'f32[40,160]{1,0:T(8,128)}', space=vmem, size = 0xa000, scoped, tag = 'scratch operand']
  %s0 = inlined_call_operand.hbm [shape: f32[2,16,64], index: 0, kind: input, shape index: {}]
  %s1 = inlined_call_operand.hbm [shape: f32[64,64], index: 1, kind: input, shape index: {}]
  %s2 = inlined_call_operand.hbm [shape: f32[16,64,64], index: 2, kind: input, shape index: {}]
  %s3 = inlined_call_operand.hbm [shape: f32[64,64], index: 3, kind: input, shape index: {}]
  %s4 = inlined_call_operand.vmem [shape: f32[1,64], index: 4, kind: input, shape index: {}]
  %s5 = inlined_call_operand.hbm [shape: f32[2,16,64], index: 5, kind: output, shape index: {}]
  %s6 = sld [smem:[#allocation0]]
  $region69: #{tpu_custom_call.1} parent=0
    _
  %s8 = ssub.s32 1, %s6
  %s9 = scalar_select 0, %s8, %s6
  $region1: #{tpu_custom_call.1} parent=0
    #allocation3 [shape = 'u8[16384]{0}', space=vmem, size = 0x4000, scoped, tag = 'input window, operand 0']
    #allocation4 [shape = 's32[2]{0}', space=sflag, size = 0x8, scoped, tag = 'scoped memory for tpu_custom_call.1']
    #allocation5 [shape = 's32[2]{0}', space=sflag, size = 0x8, scoped, tag = 'scoped memory for tpu_custom_call.1']
    #allocation6 [shape = 'u8[32768]{0}', space=vmem, size = 0x8000, scoped, tag = 'input window, operand 1, single buffered']
    #allocation7 [shape = 's32[1]{0}', space=sflag, size = 0x4, scoped, tag = 'scoped memory for tpu_custom_call.1']
    #allocation8 [shape = 'u8[524288]{0}', space=vmem, size = 0x80000, scoped, tag = 'input window, operand 2, single buffered']
    #allocation9 [shape = 'u8[32768]{0}', space=vmem, size = 0x8000, scoped, tag = 'input window, operand 3, single buffered']
    #allocation10 [shape = 's32[1]{0}', space=sflag, size = 0x4, scoped, tag = 'scoped memory for tpu_custom_call.1']
    #allocation11 [shape = 'u8[16384]{0}', space=vmem, size = 0x4000, scoped, tag = 'output window, operand 0']
    %10 = vsyncpa [#allocation4], 0
    %s11 = scalar_lea.sflag [#allocation4], 1
    %12 = vsyncpa %s11, 0
    %13 = vsyncpa [#allocation7], 0
    %14 = vsyncpa [#allocation10], 0
    %15 = vsyncpa [#allocation5], 0
    %s16 = scalar_lea.sflag [#allocation5], 1
    %17 = vsyncpa %s16, 0
    loop: start=0, step=1, limit=4
    $region2: #{tpu_custom_call.1} parent=1 // loop_pre_header
      _
    $region3: #{tpu_custom_call.1} parent=1 // loop_header
      %s19 = sphi 0, %s23
      %p20 = scmp.ge.s32.totalorder %s19, 4
      %s29 = sphi 0, %s31
      %s32 = sphi 0, %s29
      %s33 = sphi 0, %s32
      %s49 = sphi 0, %s33
      %s53 = sphi 0, %s53
      %s55 = sphi 0, %s53
      %s56 = sphi 0, %s55
      %s70 = sphi 0, %s56
      %s74 = sphi 0, %s74
      %s76 = sphi 0, %s74
      %s77 = sphi 0, %s76
      %s91 = sphi 0, %s77
      %s95 = sphi 0, %s95
      %s97 = sphi 0, %s95
      %s98 = sphi 0, %s97
      %s112 = sphi 0, %s98
      %s116 = sphi 0, %s116
      %s118 = sphi 0, %s116
      %s119 = sphi 0, %s118
      %s133 = sphi 0, %s119
      %s139 = sphi 0, %s141
      %s142 = sphi 0, %s139
      %s143 = sphi 0, %s142
      %s159 = sphi 0, %s143
    $region4: #{tpu_custom_call.1} parent=1 // loop_header_branch
      %22 = sbr.rel (%p20) target = $region8
    $region5: #{tpu_custom_call.1} parent=1 // loop_body
      %s24 = ssub.s32 %s19, 1
      %s25 = ssub.s32 %s19, 2
      %s26 = sadd.s32 %s19, 1
      %s27 = ssub.s32 %s19, %s26
      %p28 = scmp.eq.s32.totalorder %s27, 0
      %s30 = sadd.s32 %s29, 1
      %s31 = scalar_select %p28, %s29, %s30
      %p34 = pneg %p28
      %p35 = scmp.eq.s32.totalorder %s19, 1
      %p36 = por %p34, %p35
      %p37 = scmp.ne.s32.totalorder %s29, %s32
      %p38 = scmp.eq.s32.totalorder %s19, 0
      %p39 = por %p37, %p38
      %p40 = scmp.ne.s32.totalorder %s29, %s32
      %p41 = scmp.eq.s32.totalorder %s24, 1
      %p42 = por %p40, %p41
      %p43 = scmp.ne.s32.totalorder %s32, %s33
      %p44 = scmp.eq.s32.totalorder %s24, 0
      %p45 = por %p43, %p44
      %p46 = scmp.ne.s32.totalorder %s32, %s33
      %p47 = scmp.eq.s32.totalorder %s25, 1
      %p48 = por %p46, %p47
      %p50 = scmp.ne.s32.totalorder %s33, %s49
      %p51 = scmp.eq.s32.totalorder %s25, 0
      %p52 = por %p50, %p51
      %s54 = sadd.s32 %s53, 1
      %p57 = scmp.eq.s32.totalorder %s19, 1
      %p58 = scmp.ne.s32.totalorder %s53, %s55
      %p59 = scmp.eq.s32.totalorder %s19, 0
      %p60 = por %p58, %p59
      %p61 = scmp.ne.s32.totalorder %s53, %s55
      %p62 = scmp.eq.s32.totalorder %s24, 1
      %p63 = por %p61, %p62
      %p64 = scmp.ne.s32.totalorder %s55, %s56
      %p65 = scmp.eq.s32.totalorder %s24, 0
      %p66 = por %p64, %p65
      %p67 = scmp.ne.s32.totalorder %s55, %s56
      %p68 = scmp.eq.s32.totalorder %s25, 1
      %p69 = por %p67, %p68
      %p71 = scmp.ne.s32.totalorder %s56, %s70
      %p72 = scmp.eq.s32.totalorder %s25, 0
      %p73 = por %p71, %p72
      %s75 = sadd.s32 %s74, 1
      %p78 = scmp.eq.s32.totalorder %s19, 1
      %p79 = scmp.ne.s32.totalorder %s74, %s76
      %p80 = scmp.eq.s32.totalorder %s19, 0
      %p81 = por %p79, %p80
      %p82 = scmp.ne.s32.totalorder %s74, %s76
      %p83 = scmp.eq.s32.totalorder %s24, 1
      %p84 = por %p82, %p83
      %p85 = scmp.ne.s32.totalorder %s76, %s77
      %p86 = scmp.eq.s32.totalorder %s24, 0
      %p87 = por %p85, %p86
      %p88 = scmp.ne.s32.totalorder %s76, %s77
      %p89 = scmp.eq.s32.totalorder %s25, 1
      %p90 = por %p88, %p89
      %p92 = scmp.ne.s32.totalorder %s77, %s91
      %p93 = scmp.eq.s32.totalorder %s25, 0
      %p94 = por %p92, %p93
      %s96 = sadd.s32 %s95, 1
      %p99 = scmp.eq.s32.totalorder %s19, 1
      %p100 = scmp.ne.s32.totalorder %s95, %s97
      %p101 = scmp.eq.s32.totalorder %s19, 0
      %p102 = por %p100, %p101
      %p103 = scmp.ne.s32.totalorder %s95, %s97
      %p104 = scmp.eq.s32.totalorder %s24, 1
      %p105 = por %p103, %p104
      %p106 = scmp.ne.s32.totalorder %s97, %s98
      %p107 = scmp.eq.s32.totalorder %s24, 0
      %p108 = por %p106, %p107
      %p109 = scmp.ne.s32.totalorder %s97, %s98
      %p110 = scmp.eq.s32.totalorder %s25, 1
      %p111 = por %p109, %p110
      %p113 = scmp.ne.s32.totalorder %s98, %s112
      %p114 = scmp.eq.s32.totalorder %s25, 0
      %p115 = por %p113, %p114
      %s117 = sadd.s32 %s116, 1
      %p120 = scmp.eq.s32.totalorder %s19, 1
      %p121 = scmp.ne.s32.totalorder %s116, %s118
      %p122 = scmp.eq.s32.totalorder %s19, 0
      %p123 = por %p121, %p122
      %p124 = scmp.ne.s32.totalorder %s116, %s118
      %p125 = scmp.eq.s32.totalorder %s24, 1
      %p126 = por %p124, %p125
      %p127 = scmp.ne.s32.totalorder %s118, %s119
      %p128 = scmp.eq.s32.totalorder %s24, 0
      %p129 = por %p127, %p128
      %p130 = scmp.ne.s32.totalorder %s118, %s119
      %p131 = scmp.eq.s32.totalorder %s25, 1
      %p132 = por %p130, %p131
      %p134 = scmp.ne.s32.totalorder %s119, %s133
      %p135 = scmp.eq.s32.totalorder %s25, 0
      %p136 = por %p134, %p135
      %s137 = ssub.s32 %s19, %s26
      %p138 = scmp.eq.s32.totalorder %s137, 0
      %s140 = sadd.s32 %s139, 1
      %s141 = scalar_select %p138, %s139, %s140
      %p144 = pneg %p138
      %p145 = scmp.eq.s32.totalorder %s19, 1
      %p146 = por %p144, %p145
      %p147 = scmp.ne.s32.totalorder %s139, %s142
      %p148 = scmp.eq.s32.totalorder %s19, 0
      %p149 = por %p147, %p148
      %p150 = scmp.ne.s32.totalorder %s139, %s142
      %p151 = scmp.eq.s32.totalorder %s24, 1
      %p152 = por %p150, %p151
      %p153 = scmp.ne.s32.totalorder %s142, %s143
      %p154 = scmp.eq.s32.totalorder %s24, 0
      %p155 = por %p153, %p154
      %p156 = scmp.ne.s32.totalorder %s142, %s143
      %p157 = scmp.eq.s32.totalorder %s25, 1
      %p158 = por %p156, %p157
      %p160 = scmp.ne.s32.totalorder %s143, %s159
      %p161 = scmp.eq.s32.totalorder %s25, 0
      %p162 = por %p160, %p161
      %p163 = scmp.le.s32.totalorder 1, %s19
      %p164 = scmp.lt.s32.totalorder %s19, 3
      %p165 = pnand %p163, %p164
      %p166 = pneg %p165
      // Predicated region
      $region9: #{tpu_custom_call.1} parent=5 // pred_check
        _
      $region10: #{tpu_custom_call.1} parent=5 // pred_check_branch
        %168 = sbr.rel (%p165) target = $region12
      $region11: #{tpu_custom_call.1} parent=5 // pred_region
        %s169 = ssub.s32 %s19, 1
        // Predicated region
        $region13: #{tpu_custom_call.1} parent=11 // pred_check
          %p170 = pneg %p66
        $region14: #{tpu_custom_call.1} parent=11 // pred_check_branch
          %172 = sbr.rel (%p170) target = $region16
        $region15: #{tpu_custom_call.1} parent=11 // pred_region
          %s174 = ssub.s32 1024, 1024
          %175 = vsyncadd [#allocation7], %s174
          %s176 = sshll.u32 [#allocation6], 4
          %s177 = int_to_ptr.vmem [resolvable:$true] %s176
          %182 = dma.hbm_to_vmem [thread:$0]  %s1, 1024, %s177, [#allocation7], 128, 128, 8
        $region16: #{tpu_custom_call.1} parent=11 // pred_fallthru
          _
        // Predicated region
        $region17: #{tpu_custom_call.1} parent=11 // pred_check
          %p183 = pneg %p87
        $region18: #{tpu_custom_call.1} parent=11 // pred_check_branch
          %185 = sbr.rel (%p183) target = $region20
        $region19: #{tpu_custom_call.1} parent=11 // pred_region
          %s187 = ssub.s32 16384, 16384
          %188 = vsyncadd [#allocation7], %s187
          %s189 = sshll.u32 [#allocation8], 4
          %s190 = int_to_ptr.vmem [resolvable:$true] %s189
          %195 = dma.hbm_to_vmem [thread:$0]  %s2, 16384, %s190, [#allocation7], 128, 128, 8
        $region20: #{tpu_custom_call.1} parent=11 // pred_fallthru
          _
        // Predicated region
        $region21: #{tpu_custom_call.1} parent=11 // pred_check
          %p196 = pneg %p108
        $region22: #{tpu_custom_call.1} parent=11 // pred_check_branch
          %198 = sbr.rel (%p196) target = $region24
        $region23: #{tpu_custom_call.1} parent=11 // pred_region
          %s200 = ssub.s32 1024, 1024
          %201 = vsyncadd [#allocation10], %s200
          %s202 = sshll.u32 [#allocation9], 4
          %s203 = int_to_ptr.vmem [resolvable:$true] %s202
          %208 = dma.hbm_to_vmem [thread:$0]  %s3, 1024, %s203, [#allocation10], 128, 128, 8
        $region24: #{tpu_custom_call.1} parent=11 // pred_fallthru
          _
        // Predicated region
        $region25: #{tpu_custom_call.1} parent=11 // pred_check
          %p209 = pneg %p129
        $region26: #{tpu_custom_call.1} parent=11 // pred_check_branch
          %211 = sbr.rel (%p209) target = $region28
        $region27: #{tpu_custom_call.1} parent=11 // pred_region
          _
        $region28: #{tpu_custom_call.1} parent=11 // pred_fallthru
          _
      $region12: #{tpu_custom_call.1} parent=5 // pred_fallthru
        _
      %p212 = scmp.lt.s32.totalorder %s19, 2
      // Predicated region
      $region29: #{tpu_custom_call.1} parent=5 // pred_check
        %p213 = pneg %p212
      $region30: #{tpu_custom_call.1} parent=5 // pred_check_branch
        %215 = sbr.rel (%p213) target = $region32
      $region31: #{tpu_custom_call.1} parent=5 // pred_region
        // Predicated region
        $region33: #{tpu_custom_call.1} parent=31 // pred_check
          %p216 = pneg %p39
        $region34: #{tpu_custom_call.1} parent=31 // pred_check_branch
          %218 = sbr.rel (%p216) target = $region36
        $region35: #{tpu_custom_call.1} parent=31 // pred_region
          %s219 = sand.u32 %s29, 1
          %s220 = scalar_lea.sflag [#allocation4], %s219
          %s221 = sand.u32 %s29, 1
          %s222 = smul.addr %s221, 16
          %s223 = scalar_lea.vmem [#allocation3], %s222
          %s225 = ssub.s32 256, 256
          %226 = vsyncadd %s220, %s225
          %s227 = smul.addr %s19, 2
          %s228 = smul.addr %s227, 128
          %s229 = scalar_lea.hbm %s0, %s228
          %s230 = sshll.u32 %s223, 4
          %s231 = int_to_ptr.vmem [resolvable:$true] %s230
          %236 = dma.hbm_to_vmem [thread:$0]  %s229, 256, %s231, %s220, 128, 128, 8
        $region36: #{tpu_custom_call.1} parent=31 // pred_fallthru
          _
      $region32: #{tpu_custom_call.1} parent=5 // pred_fallthru
        _
      %p237 = scmp.le.s32.totalorder 1, %s19
      %p238 = scmp.lt.s32.totalorder %s19, 3
      %p239 = pnand %p237, %p238
      %p240 = pneg %p239
      // Predicated region
      $region37: #{tpu_custom_call.1} parent=5 // pred_check
        _
      $region38: #{tpu_custom_call.1} parent=5 // pred_check_branch
        %242 = sbr.rel (%p239) target = $region40
      $region39: #{tpu_custom_call.1} parent=5 // pred_region
        %s243 = ssub.s32 %s19, 1
        %s244 = sand.u32 %s32, 1
        %s245 = scalar_lea.sflag [#allocation4], %s244
        %s246 = sand.u32 %s32, 1
        %s247 = smul.addr %s246, 16
        %s248 = scalar_lea.vmem [#allocation3], %s247
        // Predicated region
        $region41: #{tpu_custom_call.1} parent=39 // pred_check
          %p249 = pneg %p45
        $region42: #{tpu_custom_call.1} parent=39 // pred_check_branch
          %251 = sbr.rel (%p249) target = $region44
        $region43: #{tpu_custom_call.1} parent=39 // pred_region
          %252 = dma.done %s245, 256
        $region44: #{tpu_custom_call.1} parent=39 // pred_fallthru
          _
        // Predicated region
        $region45: #{tpu_custom_call.1} parent=39 // pred_check
          %p253 = pneg %p66
        $region46: #{tpu_custom_call.1} parent=39 // pred_check_branch
          %255 = sbr.rel (%p253) target = $region48
        $region47: #{tpu_custom_call.1} parent=39 // pred_region
          %256 = dma.done [#allocation7], 1024
        $region48: #{tpu_custom_call.1} parent=39 // pred_fallthru
          _
        // Predicated region
        $region49: #{tpu_custom_call.1} parent=39 // pred_check
          %p257 = pneg %p87
        $region50: #{tpu_custom_call.1} parent=39 // pred_check_branch
          %259 = sbr.rel (%p257) target = $region52
        $region51: #{tpu_custom_call.1} parent=39 // pred_region
          %260 = dma.done [#allocation7], 16384
        $region52: #{tpu_custom_call.1} parent=39 // pred_fallthru
          _
        // Predicated region
        $region53: #{tpu_custom_call.1} parent=39 // pred_check
          %p261 = pneg %p108
        $region54: #{tpu_custom_call.1} parent=39 // pred_check_branch
          %263 = sbr.rel (%p261) target = $region56
        $region55: #{tpu_custom_call.1} parent=39 // pred_region
          %264 = dma.done [#allocation10], 1024
        $region56: #{tpu_custom_call.1} parent=39 // pred_fallthru
          _
        %s265 = sand.u32 %s32, 1
        %s266 = scalar_lea.sflag [#allocation4], %s265
        %s267 = sand.u32 %s32, 1
        %s268 = smul.addr %s267, 16
        %s269 = scalar_lea.vmem [#allocation3], %s268
        %p270 = pneg %p45
        %p271 = pneg %p42
        %p272 = pneg %p66
        %p273 = pneg %p63
        %p274 = pneg %p87
        %p275 = pneg %p84
        %p276 = pneg %p108
        %p277 = pneg %p105
        %p278 = pneg %p129
        %p279 = pneg %p126
        %p280 = pneg %p155
        %p281 = pneg %p152
        %s282 = sand.u32 %s142, 1
        %s283 = scalar_lea.sflag [#allocation5], %s282
        %s284 = sand.u32 %s142, 1
        %s285 = smul.addr %s284, 16
        %s286 = scalar_lea.vmem [#allocation11], %s285
        %v287 = vld [vmem:[%s248] sm:$0xff]
        %v288 = vld [vmem:[%s248 + $0x8] sm:$0xff]
        %v289 = vld [vmem:[#allocation6] sm:$0xff]
        %v290 = vld [vmem:[#allocation6 + $0x8] sm:$0xff]
        %v291 = vld [vmem:[#allocation6 + $0x10] sm:$0xff]
        %v292 = vld [vmem:[#allocation6 + $0x18] sm:$0xff]
        %v293 = vld [vmem:[#allocation6 + $0x20] sm:$0xff]
        %v294 = vld [vmem:[#allocation6 + $0x28] sm:$0xff]
        %v295 = vld [vmem:[#allocation6 + $0x30] sm:$0xff]
        %v296 = vld [vmem:[#allocation6 + $0x38] sm:$0xff]
        %vm297 = vcmask 523264
        %v298 = vsel %vm297, %v287, 0.0
        %v299 = vsel %vm297, %v288, 0.0
        %v300 = vadd.f32 %v298, %v299
        %v301 = vrot.slane %v300, 4
        %v302 = vadd.f32 %v300, %v301
        %v303 = vrot.slane %v302, 2
        %v304 = vadd.f32 %v302, %v303
        %v305 = vrot.slane %v304, 1
        %v306 = vadd.f32 %v304, %v305
        %v307 = vld [vmem:[#allocation9] sm:$0xff]
        %v308 = vld [vmem:[#allocation9 + $0x8] sm:$0xff]
        %v309 = vld [vmem:[#allocation9 + $0x10] sm:$0xff]
        %v310 = vld [vmem:[#allocation9 + $0x18] sm:$0xff]
        %v311 = vld [vmem:[#allocation9 + $0x20] sm:$0xff]
        %v312 = vld [vmem:[#allocation9 + $0x28] sm:$0xff]
        %v313 = vld [vmem:[#allocation9 + $0x30] sm:$0xff]
        %v314 = vld [vmem:[#allocation9 + $0x38] sm:$0xff]
        %v316 = vsel %vm297, %v306, 0
        %318 = vmatprep.subr.mxu0 0.0
        %319 = vmatpush1.msra.mxu0 0.0
        %320 = vmatprep.subr.mxu0 0.0
        %321 = vmatpush1.msra.mxu0 0.0
        %322 = vmatprep.subr.mxu0 0.0
        %323 = vmatpush1.msra.mxu0 0.0
        %324 = vmatprep.subr.mxu0 0.0
        %325 = vmatpush1.msra.mxu0 0.0
        %326 = vmatprep.subr.mxu0 0.0
        %327 = vmatpush1.msra.mxu0 0.0
        %328 = vmatprep.subr.mxu0 0.0
        %329 = vmatpush1.msra.mxu0 0.0
        %330 = vmatprep.subr.mxu0 0.0
        %331 = vmatpush1.msra.mxu0 0.0
        %332 = vmatprep.subr.mxu0 0.0
        %333 = vmatpush1.msra.mxu0 0.0
        %334 = vmatprep.subr.mxu0 0.0
        %335 = vmatpush1.msra.mxu0 %v314
        %336 = vmatprep.subr.mxu0 0.0
        %337 = vmatpush1.msra.mxu0 %v313
        %338 = vmatprep.subr.mxu0 0.0
        %339 = vmatpush1.msra.mxu0 %v312
        %340 = vmatprep.subr.mxu0 0.0
        %341 = vmatpush1.msra.mxu0 %v311
        %342 = vmatprep.subr.mxu0 0.0
        %343 = vmatpush1.msra.mxu0 %v310
        %344 = vmatprep.subr.mxu0 0.0
        %345 = vmatpush1.msra.mxu0 %v309
        %346 = vmatprep.subr.mxu0 0.0
        %347 = vmatpush1.msra.mxu0 %v308
        %348 = vmatprep.subr.mxu0 0.0
        %349 = vmatpush1.msra.mxu0 %v307
        %350 = vmatprep.subr.mxu0 0.0
        %351 = vmatpush2.msra.mxu0 0.0
        %352 = vmatprep.subr.mxu0 0.0
        %353 = vmatpush2.msra.mxu0 0.0
        %354 = vmatprep.subr.mxu0 0.0
        %355 = vmatpush2.msra.mxu0 0.0
        %356 = vmatprep.subr.mxu0 0.0
        %357 = vmatpush2.msra.mxu0 0.0
        %358 = vmatprep.subr.mxu0 0.0
        %359 = vmatpush2.msra.mxu0 0.0
        %360 = vmatprep.subr.mxu0 0.0
        %361 = vmatpush2.msra.mxu0 0.0
        %362 = vmatprep.subr.mxu0 0.0
        %363 = vmatpush2.msra.mxu0 0.0
        %364 = vmatprep.subr.mxu0 0.0
        %365 = vmatpush2.msra.mxu0 0.0
        %366 = vmatprep.subr.mxu0 0.0
        %367 = vmatpush2.msra.mxu0 0.0
        %368 = vmatprep.subr.mxu0 0.0
        %369 = vmatpush2.msra.mxu0 0.0
        %370 = vmatprep.subr.mxu0 0.0
        %371 = vmatpush2.msra.mxu0 0.0
        %372 = vmatprep.subr.mxu0 0.0
        %373 = vmatpush2.msra.mxu0 0.0
        %374 = vmatprep.subr.mxu0 0.0
        %375 = vmatpush2.msra.mxu0 0.0
        %376 = vmatprep.subr.mxu0 0.0
        %377 = vmatpush2.msra.mxu0 0.0
        %378 = vmatprep.subr.mxu0 0.0
        %379 = vmatpush2.msra.mxu0 0.0
        %380 = vmatprep.subr.mxu0 0.0
        %381 = vmatpush2.msra.mxu0 0.0
        %382 = vmatprep.mubr.f32.mxu0 0.0
        %383 = vmatmul.mubr.f32.gmra.mxu0 %v316
        %v384 = vpop.f32.mrf.mxu0
        %v385 = vadd.f32 0.0, %v384
        %v386 = vpop.f32.mrf.mxu0
        %387 = vdwg.mxu0
        %v388 = vlaneseq
        %v389 = vshrl.u32 %v388, 7
        %v390 = vsub.s32 0, %v389
        %v391 = vrot.slane %v385, %v390
        %v393 = vsel %vm297, %v287, 0
        %v396 = vsel %vm297, %v288, 0
        %398 = vmatprep.subr.mxu0 0.0
        %399 = vmatpush1.msra.mxu0 0.0
        %400 = vmatprep.subr.mxu0 0.0
        %401 = vmatpush1.msra.mxu0 0.0
        %402 = vmatprep.subr.mxu0 0.0
        %403 = vmatpush1.msra.mxu0 0.0
        %404 = vmatprep.subr.mxu0 0.0
        %405 = vmatpush1.msra.mxu0 0.0
        %406 = vmatprep.subr.mxu0 0.0
        %407 = vmatpush1.msra.mxu0 0.0
        %408 = vmatprep.subr.mxu0 0.0
        %409 = vmatpush1.msra.mxu0 0.0
        %410 = vmatprep.subr.mxu0 0.0
        %411 = vmatpush1.msra.mxu0 0.0
        %412 = vmatprep.subr.mxu0 0.0
        %413 = vmatpush1.msra.mxu0 0.0
        %414 = vmatprep.subr.mxu0 0.0
        %415 = vmatpush1.msra.mxu0 %v296
        %416 = vmatprep.subr.mxu0 0.0
        %417 = vmatpush1.msra.mxu0 %v295
        %418 = vmatprep.subr.mxu0 0.0
        %419 = vmatpush1.msra.mxu0 %v294
        %420 = vmatprep.subr.mxu0 0.0
        %421 = vmatpush1.msra.mxu0 %v293
        %422 = vmatprep.subr.mxu0 0.0
        %423 = vmatpush1.msra.mxu0 %v292
        %424 = vmatprep.subr.mxu0 0.0
        %425 = vmatpush1.msra.mxu0 %v291
        %426 = vmatprep.subr.mxu0 0.0
        %427 = vmatpush1.msra.mxu0 %v290
        %428 = vmatprep.subr.mxu0 0.0
        %429 = vmatpush1.msra.mxu0 %v289
        %430 = vmatprep.subr.mxu0 0.0
        %431 = vmatpush2.msra.mxu0 0.0
        %432 = vmatprep.subr.mxu0 0.0
        %433 = vmatpush2.msra.mxu0 0.0
        %434 = vmatprep.subr.mxu0 0.0
        %435 = vmatpush2.msra.mxu0 0.0
        %436 = vmatprep.subr.mxu0 0.0
        %437 = vmatpush2.msra.mxu0 0.0
        %438 = vmatprep.subr.mxu0 0.0
        %439 = vmatpush2.msra.mxu0 0.0
        %440 = vmatprep.subr.mxu0 0.0
        %441 = vmatpush2.msra.mxu0 0.0
        %442 = vmatprep.subr.mxu0 0.0
        %443 = vmatpush2.msra.mxu0 0.0
        %444 = vmatprep.subr.mxu0 0.0
        %445 = vmatpush2.msra.mxu0 0.0
        %446 = vmatprep.subr.mxu0 0.0
        %447 = vmatpush2.msra.mxu0 0.0
        %448 = vmatprep.subr.mxu0 0.0
        %449 = vmatpush2.msra.mxu0 0.0
        %450 = vmatprep.subr.mxu0 0.0
        %451 = vmatpush2.msra.mxu0 0.0
        %452 = vmatprep.subr.mxu0 0.0
        %453 = vmatpush2.msra.mxu0 0.0
        %454 = vmatprep.subr.mxu0 0.0
        %455 = vmatpush2.msra.mxu0 0.0
        %456 = vmatprep.subr.mxu0 0.0
        %457 = vmatpush2.msra.mxu0 0.0
        %458 = vmatprep.subr.mxu0 0.0
        %459 = vmatpush2.msra.mxu0 0.0
        %460 = vmatprep.subr.mxu0 0.0
        %461 = vmatpush2.msra.mxu0 0.0
        %462 = vmatprep.mubr.f32.mxu0 0.0
        %463 = vmatmul.mubr.f32.gmra.mxu0 %v393
        %v464 = vpop.f32.mrf.mxu0
        %v465 = vadd.f32 %v391, %v464
        %v466 = vpop.f32.mrf.mxu0
        %467 = vmatprep.mubr.f32.mxu0 0.0
        %468 = vmatmul.mubr.f32.gmra.mxu0 %v396
        %v469 = vpop.f32.mrf.mxu0
        %v470 = vadd.f32 %v391, %v469
        %v471 = vpop.f32.mrf.mxu0
        %472 = vdwg.mxu0
        %v473 = vld [vmem:[%s4] sm:$0x1]
        %v475 = vlaneseq
        %v476 = vshrl.u32 %v475, 7
        %v477 = vsub.s32 0, %v476
        %v478 = vrot.slane %v473, %v477
        %v480 = vadd.f32 %v465, %v478
        %v481 = vadd.f32 %v470, %v478
        %482 = vst [vmem:[#allocation2] sm:$0xff] 0.0
        %vm483 = vcmask 261120
        %484 = vst.msk [vmem:[#allocation2 + $0x8] sm:$0xff] %vm483, 0.0
        %485 = vst [vmem:[#allocation2 + $0x10] sm:$0xff] 0.0
        %486 = vst.msk [vmem:[#allocation2 + $0x18] sm:$0xff] %vm483, 0.0
        %487 = vst [vmem:[#allocation2 + $0x20] sm:$0xff] 0.0
        %488 = vst.msk [vmem:[#allocation2 + $0x28] sm:$0xff] %vm483, 0.0
        %489 = vst [vmem:[#allocation2 + $0x30] sm:$0xff] 0.0
        %490 = vst.msk [vmem:[#allocation2 + $0x38] sm:$0xff] %vm483, 0.0
        %491 = vst [vmem:[#allocation2 + $0x40] sm:$0xff] 0.0
        %492 = vst.msk [vmem:[#allocation2 + $0x48] sm:$0xff] %vm483, 0.0
        %vm493 = vcmask 1043456
        %v494 = vrot.slane %v287, 4
        %v495 = vrot.slane %v288, 4
        %v496 = vsel %vm493, %v494, %v495
        %497 = vrot.lane.b32.xlu0 %v494, 48
        %v498 = vpop.permute.xlu0 %497
        %499 = vrot.lane.b32.xlu0 %v496, 48
        %v500 = vpop.permute.xlu0 %499
        %501 = vrot.lane.b32.xlu0 %v495, 48
        %v502 = vpop.permute.xlu0 %501
        %vm506 = vcmask 916868
        %507 = vst.msk [vmem:[#allocation2 + $0x10] sm:$0xf0] %vm506, %v498
        %vm508 = vcmask 916864
        %509 = vst.msk [vmem:[#allocation2 + $0x20] sm:$0xff] %vm508, %v500
        %vm510 = vcmask 912768
        %511 = vst.msk [vmem:[#allocation2 + $0x30] sm:$0xf] %vm510, %v502
        %v512 = vld [vmem:[#allocation2] sm:$0xc0]
        %v513 = vld [vmem:[#allocation2 + $0x10] sm:$0xff]
        %v514 = vld [vmem:[#allocation2 + $0x20] sm:$0x3f]
        %v515 = vld [vmem:[#allocation8] sm:$0xff]
        %v516 = vld [vmem:[#allocation8 + $0x8] sm:$0xff]
        %v517 = vld [vmem:[#allocation8 + $0x10] sm:$0xff]
        %v518 = vld [vmem:[#allocation8 + $0x18] sm:$0xff]
        %v519 = vld [vmem:[#allocation8 + $0x20] sm:$0xff]
        %v520 = vld [vmem:[#allocation8 + $0x28] sm:$0xff]
        %v521 = vld [vmem:[#allocation8 + $0x30] sm:$0xff]
        %v522 = vld [vmem:[#allocation8 + $0x38] sm:$0xff]
        %vm526 = vcmask 1041408
        %v527 = vrot.slane %v512, 6
        %v528 = vrot.slane %v513, 6
        %v529 = vsel %vm526, %v527, %v528
        %v530 = vrot.slane %v514, 6
        %v531 = vsel %vm526, %v528, %v530
        %532 = vrot.lane.b32.xlu0 %v529, 104
        %v533 = vpop.permute.xlu0 %532
        %534 = vrot.lane.b32.xlu0 %v531, 104
        %v535 = vpop.permute.xlu0 %534
        %v536 = vsel %vm297, %v533, 0
        %v538 = vsel %vm297, %v535, 0
        %540 = vmatprep.subr.mxu0 0.0
        %541 = vmatpush1.msra.mxu0 0.0
        %542 = vmatprep.subr.mxu0 0.0
        %543 = vmatpush1.msra.mxu0 0.0
        %544 = vmatprep.subr.mxu0 0.0
        %545 = vmatpush1.msra.mxu0 0.0
        %546 = vmatprep.subr.mxu0 0.0
        %547 = vmatpush1.msra.mxu0 0.0
        %548 = vmatprep.subr.mxu0 0.0
        %549 = vmatpush1.msra.mxu0 0.0
        %550 = vmatprep.subr.mxu0 0.0
        %551 = vmatpush1.msra.mxu0 0.0
        %552 = vmatprep.subr.mxu0 0.0
        %553 = vmatpush1.msra.mxu0 0.0
        %554 = vmatprep.subr.mxu0 0.0
        %555 = vmatpush1.msra.mxu0 0.0
        %556 = vmatprep.subr.mxu0 0.0
        %557 = vmatpush1.msra.mxu0 %v522
        %558 = vmatprep.subr.mxu0 0.0
        %559 = vmatpush1.msra.mxu0 %v521
        %560 = vmatprep.subr.mxu0 0.0
        %561 = vmatpush1.msra.mxu0 %v520
        %562 = vmatprep.subr.mxu0 0.0
        %563 = vmatpush1.msra.mxu0 %v519
        %564 = vmatprep.subr.mxu0 0.0
        %565 = vmatpush1.msra.mxu0 %v518
        %566 = vmatprep.subr.mxu0 0.0
        %567 = vmatpush1.msra.mxu0 %v517
        %568 = vmatprep.subr.mxu0 0.0
        %569 = vmatpush1.msra.mxu0 %v516
        %570 = vmatprep.subr.mxu0 0.0
        %571 = vmatpush1.msra.mxu0 %v515
        %572 = vmatprep.subr.mxu0 0.0
        %573 = vmatpush2.msra.mxu0 0.0
        %574 = vmatprep.subr.mxu0 0.0
        %575 = vmatpush2.msra.mxu0 0.0
        %576 = vmatprep.subr.mxu0 0.0
        %577 = vmatpush2.msra.mxu0 0.0
        %578 = vmatprep.subr.mxu0 0.0
        %579 = vmatpush2.msra.mxu0 0.0
        %580 = vmatprep.subr.mxu0 0.0
        %581 = vmatpush2.msra.mxu0 0.0
        %582 = vmatprep.subr.mxu0 0.0
        %583 = vmatpush2.msra.mxu0 0.0
        %584 = vmatprep.subr.mxu0 0.0
        %585 = vmatpush2.msra.mxu0 0.0
        %586 = vmatprep.subr.mxu0 0.0
        %587 = vmatpush2.msra.mxu0 0.0
        %588 = vmatprep.subr.mxu0 0.0
        %589 = vmatpush2.msra.mxu0 0.0
        %590 = vmatprep.subr.mxu0 0.0
        %591 = vmatpush2.msra.mxu0 0.0
        %592 = vmatprep.subr.mxu0 0.0
        %593 = vmatpush2.msra.mxu0 0.0
        %594 = vmatprep.subr.mxu0 0.0
        %595 = vmatpush2.msra.mxu0 0.0
        %596 = vmatprep.subr.mxu0 0.0
        %597 = vmatpush2.msra.mxu0 0.0
        %598 = vmatprep.subr.mxu0 0.0
        %599 = vmatpush2.msra.mxu0 0.0
        %600 = vmatprep.subr.mxu0 0.0
        %601 = vmatpush2.msra.mxu0 0.0
        %602 = vmatprep.subr.mxu0 0.0
        %603 = vmatpush2.msra.mxu0 0.0
        %604 = vmatprep.mubr.f32.mxu0 0.0
        %605 = vmatmul.mubr.f32.gmra.mxu0 %v536
        %v606 = vpop.f32.mrf.mxu0
        %v607 = vadd.f32 0.0, %v606
        %v608 = vpop.f32.mrf.mxu0
        %609 = vmatprep.mubr.f32.mxu0 0.0
        %610 = vmatmul.mubr.f32.gmra.mxu0 %v538
        %v611 = vpop.f32.mrf.mxu0
        %v612 = vadd.f32 0.0, %v611
        %v613 = vpop.f32.mrf.mxu0
        %614 = vdwg.mxu0
        %v615 = vadd.f32 %v480, %v607
        %v616 = vadd.f32 %v481, %v612
        %s617 = scalar_lea.vmem [#allocation8], 64
        %v618 = vld [vmem:[%s617] sm:$0xff]
        %v619 = vld [vmem:[%s617 + $0x8] sm:$0xff]
        %v620 = vld [vmem:[%s617 + $0x10] sm:$0xff]
        %v621 = vld [vmem:[%s617 + $0x18] sm:$0xff]
        %v622 = vld [vmem:[%s617 + $0x20] sm:$0xff]
        %v623 = vld [vmem:[%s617 + $0x28] sm:$0xff]
        %v624 = vld [vmem:[%s617 + $0x30] sm:$0xff]
        %v625 = vld [vmem:[%s617 + $0x38] sm:$0xff]
        %626 = vrot.lane.b32.xlu0 %v529, 80
        %v627 = vpop.permute.xlu0 %626
        %628 = vrot.lane.b32.xlu0 %v531, 80
        %v629 = vpop.permute.xlu0 %628
        %v630 = vsel %vm297, %v627, 0
        %v632 = vsel %vm297, %v629, 0
        %634 = vmatprep.subr.mxu0 0.0
        %635 = vmatpush1.msra.mxu0 0.0
        %636 = vmatprep.subr.mxu0 0.0
        %637 = vmatpush1.msra.mxu0 0.0
        %638 = vmatprep.subr.mxu0 0.0
        %639 = vmatpush1.msra.mxu0 0.0
        %640 = vmatprep.subr.mxu0 0.0
        %641 = vmatpush1.msra.mxu0 0.0
        %642 = vmatprep.subr.mxu0 0.0
        %643 = vmatpush1.msra.mxu0 0.0
        %644 = vmatprep.subr.mxu0 0.0
        %645 = vmatpush1.msra.mxu0 0.0
        %646 = vmatprep.subr.mxu0 0.0
        %647 = vmatpush1.msra.mxu0 0.0
        %648 = vmatprep.subr.mxu0 0.0
        %649 = vmatpush1.msra.mxu0 0.0
        %650 = vmatprep.subr.mxu0 0.0
        %651 = vmatpush1.msra.mxu0 %v625
        %652 = vmatprep.subr.mxu0 0.0
        %653 = vmatpush1.msra.mxu0 %v624
        %654 = vmatprep.subr.mxu0 0.0
        %655 = vmatpush1.msra.mxu0 %v623
        %656 = vmatprep.subr.mxu0 0.0
        %657 = vmatpush1.msra.mxu0 %v622
        %658 = vmatprep.subr.mxu0 0.0
        %659 = vmatpush1.msra.mxu0 %v621
        %660 = vmatprep.subr.mxu0 0.0
        %661 = vmatpush1.msra.mxu0 %v620
        %662 = vmatprep.subr.mxu0 0.0
        %663 = vmatpush1.msra.mxu0 %v619
        %664 = vmatprep.subr.mxu0 0.0
        %665 = vmatpush1.msra.mxu0 %v618
        %666 = vmatprep.subr.mxu0 0.0
        %667 = vmatpush2.msra.mxu0 0.0
        %668 = vmatprep.subr.mxu0 0.0
        %669 = vmatpush2.msra.mxu0 0.0
        %670 = vmatprep.subr.mxu0 0.0
        %671 = vmatpush2.msra.mxu0 0.0
        %672 = vmatprep.subr.mxu0 0.0
        %673 = vmatpush2.msra.mxu0 0.0
        %674 = vmatprep.subr.mxu0 0.0
        %675 = vmatpush2.msra.mxu0 0.0
        %676 = vmatprep.subr.mxu0 0.0
        %677 = vmatpush2.msra.mxu0 0.0
        %678 = vmatprep.subr.mxu0 0.0
        %679 = vmatpush2.msra.mxu0 0.0
        %680 = vmatprep.subr.mxu0 0.0
        %681 = vmatpush2.msra.mxu0 0.0
        %682 = vmatprep.subr.mxu0 0.0
        %683 = vmatpush2.msra.mxu0 0.0
        %684 = vmatprep.subr.mxu0 0.0
        %685 = vmatpush2.msra.mxu0 0.0
        %686 = vmatprep.subr.mxu0 0.0
        %687 = vmatpush2.msra.mxu0 0.0
        %688 = vmatprep.subr.mxu0 0.0
        %689 = vmatpush2.msra.mxu0 0.0
        %690 = vmatprep.subr.mxu0 0.0
        %691 = vmatpush2.msra.mxu0 0.0
        %692 = vmatprep.subr.mxu0 0.0
        %693 = vmatpush2.msra.mxu0 0.0
        %694 = vmatprep.subr.mxu0 0.0
        %695 = vmatpush2.msra.mxu0 0.0
        %696 = vmatprep.subr.mxu0 0.0
        %697 = vmatpush2.msra.mxu0 0.0
        %698 = vmatprep.mubr.f32.mxu0 0.0
        %699 = vmatmul.mubr.f32.gmra.mxu0 %v630
        %v700 = vpop.f32.mrf.mxu0
        %v701 = vadd.f32 0.0, %v700
        %v702 = vpop.f32.mrf.mxu0
        %703 = vmatprep.mubr.f32.mxu0 0.0
        %704 = vmatmul.mubr.f32.gmra.mxu0 %v632
        %v705 = vpop.f32.mrf.mxu0
        %v706 = vadd.f32 0.0, %v705
        %v707 = vpop.f32.mrf.mxu0
        %708 = vdwg.mxu0
        %v709 = vadd.f32 %v615, %v701
        %v710 = vadd.f32 %v616, %v706
        %v711 = vld [vmem:[#allocation2] sm:$0xc0]
        %v712 = vld [vmem:[#allocation2 + $0x8] sm:$0xc0]
        %v713 = vld [vmem:[#allocation2 + $0x10] sm:$0xff]
        %v714 = vld [vmem:[#allocation2 + $0x18] sm:$0xff]
        %v715 = vld [vmem:[#allocation2 + $0x20] sm:$0x3f]
        %v716 = vld [vmem:[#allocation2 + $0x28] sm:$0x3f]
        %s717 = scalar_lea.vmem [#allocation8], 128
        %v718 = vld [vmem:[%s717] sm:$0xff]
        %v719 = vld [vmem:[%s717 + $0x8] sm:$0xff]
        %v720 = vld [vmem:[%s717 + $0x10] sm:$0xff]
        %v721 = vld [vmem:[%s717 + $0x18] sm:$0xff]
        %v722 = vld [vmem:[%s717 + $0x20] sm:$0xff]
        %v723 = vld [vmem:[%s717 + $0x28] sm:$0xff]
        %v724 = vld [vmem:[%s717 + $0x30] sm:$0xff]
        %v725 = vld [vmem:[%s717 + $0x38] sm:$0xff]
        %v732 = vrot.slane %v711, 6
        %v733 = vrot.slane %v713, 6
        %v734 = vsel %vm526, %v732, %v733
        %v735 = vrot.slane %v712, 6
        %v736 = vrot.slane %v714, 6
        %v737 = vsel %vm526, %v735, %v736
        %v738 = vrot.slane %v715, 6
        %v739 = vsel %vm526, %v733, %v738
        %v740 = vrot.slane %v716, 6
        %v741 = vsel %vm526, %v736, %v740
        %742 = vrot.lane.b32.xlu0 %v734, 56
        %v743 = vpop.permute.xlu0 %742
        %744 = vrot.lane.b32.xlu0 %v737, 56
        %v745 = vpop.permute.xlu0 %744
        %746 = vrot.lane.b32.xlu0 %v739, 56
        %v747 = vpop.permute.xlu0 %746
        %748 = vrot.lane.b32.xlu0 %v741, 56
        %v749 = vpop.permute.xlu0 %748
        %vm750 = vcmask 457728
        %v751 = vsel %vm750, %v743, %v745
        %v752 = vsel %vm750, %v747, %v749
        %v753 = vsel %vm297, %v751, 0
        %v755 = vsel %vm297, %v752, 0
        %757 = vmatprep.subr.mxu0 0.0
        %758 = vmatpush1.msra.mxu0 0.0
        %759 = vmatprep.subr.mxu0 0.0
        %760 = vmatpush1.msra.mxu0 0.0
        %761 = vmatprep.subr.mxu0 0.0
        %762 = vmatpush1.msra.mxu0 0.0
        %763 = vmatprep.subr.mxu0 0.0
        %764 = vmatpush1.msra.mxu0 0.0
        %765 = vmatprep.subr.mxu0 0.0
        %766 = vmatpush1.msra.mxu0 0.0
        %767 = vmatprep.subr.mxu0 0.0
        %768 = vmatpush1.msra.mxu0 0.0
        %769 = vmatprep.subr.mxu0 0.0
        %770 = vmatpush1.msra.mxu0 0.0
        %771 = vmatprep.subr.mxu0 0.0
        %772 = vmatpush1.msra.mxu0 0.0
        %773 = vmatprep.subr.mxu0 0.0
        %774 = vmatpush1.msra.mxu0 %v725
        %775 = vmatprep.subr.mxu0 0.0
        %776 = vmatpush1.msra.mxu0 %v724
        %777 = vmatprep.subr.mxu0 0.0
        %778 = vmatpush1.msra.mxu0 %v723
        %779 = vmatprep.subr.mxu0 0.0
        %780 = vmatpush1.msra.mxu0 %v722
        %781 = vmatprep.subr.mxu0 0.0
        %782 = vmatpush1.msra.mxu0 %v721
        %783 = vmatprep.subr.mxu0 0.0
        %784 = vmatpush1.msra.mxu0 %v720
        %785 = vmatprep.subr.mxu0 0.0
        %786 = vmatpush1.msra.mxu0 %v719
        %787 = vmatprep.subr.mxu0 0.0
        %788 = vmatpush1.msra.mxu0 %v718
        %789 = vmatprep.subr.mxu0 0.0
        %790 = vmatpush2.msra.mxu0 0.0
        %791 = vmatprep.subr.mxu0 0.0
        %792 = vmatpush2.msra.mxu0 0.0
        %793 = vmatprep.subr.mxu0 0.0
        %794 = vmatpush2.msra.mxu0 0.0
        %795 = vmatprep.subr.mxu0 0.0
        %796 = vmatpush2.msra.mxu0 0.0
        %797 = vmatprep.subr.mxu0 0.0
        %798 = vmatpush2.msra.mxu0 0.0
        %799 = vmatprep.subr.mxu0 0.0
        %800 = vmatpush2.msra.mxu0 0.0
        %801 = vmatprep.subr.mxu0 0.0
        %802 = vmatpush2.msra.mxu0 0.0
        %803 = vmatprep.subr.mxu0 0.0
        %804 = vmatpush2.msra.mxu0 0.0
        %805 = vmatprep.subr.mxu0 0.0
        %806 = vmatpush2.msra.mxu0 0.0
        %807 = vmatprep.subr.mxu0 0.0
        %808 = vmatpush2.msra.mxu0 0.0
        %809 = vmatprep.subr.mxu0 0.0
        %810 = vmatpush2.msra.mxu0 0.0
        %811 = vmatprep.subr.mxu0 0.0
        %812 = vmatpush2.msra.mxu0 0.0
        %813 = vmatprep.subr.mxu0 0.0
        %814 = vmatpush2.msra.mxu0 0.0
        %815 = vmatprep.subr.mxu0 0.0
        %816 = vmatpush2.msra.mxu0 0.0
        %817 = vmatprep.subr.mxu0 0.0
        %818 = vmatpush2.msra.mxu0 0.0
        %819 = vmatprep.subr.mxu0 0.0
        %820 = vmatpush2.msra.mxu0 0.0
        %821 = vmatprep.mubr.f32.mxu0 0.0
        %822 = vmatmul.mubr.f32.gmra.mxu0 %v753
        %v823 = vpop.f32.mrf.mxu0
        %v824 = vadd.f32 0.0, %v823
        %v825 = vpop.f32.mrf.mxu0
        %826 = vmatprep.mubr.f32.mxu0 0.0
        %827 = vmatmul.mubr.f32.gmra.mxu0 %v755
        %v828 = vpop.f32.mrf.mxu0
        %v829 = vadd.f32 0.0, %v828
        %v830 = vpop.f32.mrf.mxu0
        %831 = vdwg.mxu0
        %v832 = vadd.f32 %v709, %v824
        %v833 = vadd.f32 %v710, %v829
        %v834 = vld [vmem:[#allocation2 + $0x10] sm:$0xf0]
        %v835 = vld [vmem:[#allocation2 + $0x20] sm:$0xff]
        %v836 = vld [vmem:[#allocation2 + $0x30] sm:$0xf]
        %s837 = scalar_lea.vmem [#allocation8], 192
        %v838 = vld [vmem:[%s837] sm:$0xff]
        %v839 = vld [vmem:[%s837 + $0x8] sm:$0xff]
        %v840 = vld [vmem:[%s837 + $0x10] sm:$0xff]
        %v841 = vld [vmem:[%s837 + $0x18] sm:$0xff]
        %v842 = vld [vmem:[%s837 + $0x20] sm:$0xff]
        %v843 = vld [vmem:[%s837 + $0x28] sm:$0xff]
        %v844 = vld [vmem:[%s837 + $0x30] sm:$0xff]
        %v845 = vld [vmem:[%s837 + $0x38] sm:$0xff]
        %v849 = vrot.slane %v834, 4
        %v850 = vrot.slane %v835, 4
        %v851 = vsel %vm493, %v849, %v850
        %v852 = vrot.slane %v836, 4
        %v853 = vsel %vm493, %v850, %v852
        %854 = vrot.lane.b32.xlu0 %v851, 104
        %v855 = vpop.permute.xlu0 %854
        %856 = vrot.lane.b32.xlu0 %v853, 104
        %v857 = vpop.permute.xlu0 %856
        %v858 = vsel %vm297, %v855, 0
        %v860 = vsel %vm297, %v857, 0
        %862 = vmatprep.subr.mxu0 0.0
        %863 = vmatpush1.msra.mxu0 0.0
        %864 = vmatprep.subr.mxu0 0.0
        %865 = vmatpush1.msra.mxu0 0.0
        %866 = vmatprep.subr.mxu0 0.0
        %867 = vmatpush1.msra.mxu0 0.0
        %868 = vmatprep.subr.mxu0 0.0
        %869 = vmatpush1.msra.mxu0 0.0
        %870 = vmatprep.subr.mxu0 0.0
        %871 = vmatpush1.msra.mxu0 0.0
        %872 = vmatprep.subr.mxu0 0.0
        %873 = vmatpush1.msra.mxu0 0.0
        %874 = vmatprep.subr.mxu0 0.0
        %875 = vmatpush1.msra.mxu0 0.0
        %876 = vmatprep.subr.mxu0 0.0
        %877 = vmatpush1.msra.mxu0 0.0
        %878 = vmatprep.subr.mxu0 0.0
        %879 = vmatpush1.msra.mxu0 %v845
        %880 = vmatprep.subr.mxu0 0.0
        %881 = vmatpush1.msra.mxu0 %v844
        %882 = vmatprep.subr.mxu0 0.0
        %883 = vmatpush1.msra.mxu0 %v843
        %884 = vmatprep.subr.mxu0 0.0
        %885 = vmatpush1.msra.mxu0 %v842
        %886 = vmatprep.subr.mxu0 0.0
        %887 = vmatpush1.msra.mxu0 %v841
        %888 = vmatprep.subr.mxu0 0.0
        %889 = vmatpush1.msra.mxu0 %v840
        %890 = vmatprep.subr.mxu0 0.0
        %891 = vmatpush1.msra.mxu0 %v839
        %892 = vmatprep.subr.mxu0 0.0
        %893 = vmatpush1.msra.mxu0 %v838
        %894 = vmatprep.subr.mxu0 0.0
        %895 = vmatpush2.msra.mxu0 0.0
        %896 = vmatprep.subr.mxu0 0.0
        %897 = vmatpush2.msra.mxu0 0.0
        %898 = vmatprep.subr.mxu0 0.0
        %899 = vmatpush2.msra.mxu0 0.0
        %900 = vmatprep.subr.mxu0 0.0
        %901 = vmatpush2.msra.mxu0 0.0
        %902 = vmatprep.subr.mxu0 0.0
        %903 = vmatpush2.msra.mxu0 0.0
        %904 = vmatprep.subr.mxu0 0.0
        %905 = vmatpush2.msra.mxu0 0.0
        %906 = vmatprep.subr.mxu0 0.0
        %907 = vmatpush2.msra.mxu0 0.0
        %908 = vmatprep.subr.mxu0 0.0
        %909 = vmatpush2.msra.mxu0 0.0
        %910 = vmatprep.subr.mxu0 0.0
        %911 = vmatpush2.msra.mxu0 0.0
        %912 = vmatprep.subr.mxu0 0.0
        %913 = vmatpush2.msra.mxu0 0.0
        %914 = vmatprep.subr.mxu0 0.0
        %915 = vmatpush2.msra.mxu0 0.0
        %916 = vmatprep.subr.mxu0 0.0
        %917 = vmatpush2.msra.mxu0 0.0
        %918 = vmatprep.subr.mxu0 0.0
        %919 = vmatpush2.msra.mxu0 0.0
        %920 = vmatprep.subr.mxu0 0.0
        %921 = vmatpush2.msra.mxu0 0.0
        %922 = vmatprep.subr.mxu0 0.0
        %923 = vmatpush2.msra.mxu0 0.0
        %924 = vmatprep.subr.mxu0 0.0
        %925 = vmatpush2.msra.mxu0 0.0
        %926 = vmatprep.mubr.f32.mxu0 0.0
        %927 = vmatmul.mubr.f32.gmra.mxu0 %v858
        %v928 = vpop.f32.mrf.mxu0
        %v929 = vadd.f32 0.0, %v928
        %v930 = vpop.f32.mrf.mxu0
        %931 = vmatprep.mubr.f32.mxu0 0.0
        %932 = vmatmul.mubr.f32.gmra.mxu0 %v860
        %v933 = vpop.f32.mrf.mxu0
        %v934 = vadd.f32 0.0, %v933
        %v935 = vpop.f32.mrf.mxu0
        %936 = vdwg.mxu0
        %v937 = vadd.f32 %v832, %v929
        %v938 = vadd.f32 %v833, %v934
        %v939 = vld [vmem:[#allocation2 + $0x10] sm:$0xf0]
        %v940 = vld [vmem:[#allocation2 + $0x18] sm:$0xf0]
        %v941 = vld [vmem:[#allocation2 + $0x20] sm:$0xff]
        %v942 = vld [vmem:[#allocation2 + $0x28] sm:$0xff]
        %v943 = vld [vmem:[#allocation2 + $0x30] sm:$0xf]
        %v944 = vld [vmem:[#allocation2 + $0x38] sm:$0xf]
        %s945 = scalar_lea.vmem [#allocation8], 256
        %v946 = vld [vmem:[%s945] sm:$0xff]
        %v947 = vld [vmem:[%s945 + $0x8] sm:$0xff]
        %v948 = vld [vmem:[%s945 + $0x10] sm:$0xff]
        %v949 = vld [vmem:[%s945 + $0x18] sm:$0xff]
        %v950 = vld [vmem:[%s945 + $0x20] sm:$0xff]
        %v951 = vld [vmem:[%s945 + $0x28] sm:$0xff]
        %v952 = vld [vmem:[%s945 + $0x30] sm:$0xff]
        %v953 = vld [vmem:[%s945 + $0x38] sm:$0xff]
        %v960 = vrot.slane %v939, 4
        %v961 = vrot.slane %v941, 4
        %v962 = vsel %vm493, %v960, %v961
        %v963 = vrot.slane %v940, 4
        %v964 = vrot.slane %v942, 4
        %v965 = vsel %vm493, %v963, %v964
        %v966 = vrot.slane %v943, 4
        %v967 = vsel %vm493, %v961, %v966
        %v968 = vrot.slane %v944, 4
        %v969 = vsel %vm493, %v964, %v968
        %970 = vrot.lane.b32.xlu0 %v962, 56
        %v971 = vpop.permute.xlu0 %970
        %972 = vrot.lane.b32.xlu0 %v965, 56
        %v973 = vpop.permute.xlu0 %972
        %974 = vrot.lane.b32.xlu0 %v967, 56
        %v975 = vpop.permute.xlu0 %974
        %976 = vrot.lane.b32.xlu0 %v969, 56
        %v977 = vpop.permute.xlu0 %976
        %v978 = vsel %vm750, %v971, %v973
        %v979 = vsel %vm750, %v975, %v977
        %v980 = vsel %vm297, %v978, 0
        %v982 = vsel %vm297, %v979, 0
        %984 = vmatprep.subr.mxu0 0.0
        %985 = vmatpush1.msra.mxu0 0.0
        %986 = vmatprep.subr.mxu0 0.0
        %987 = vmatpush1.msra.mxu0 0.0
        %988 = vmatprep.subr.mxu0 0.0
        %989 = vmatpush1.msra.mxu0 0.0
        %990 = vmatprep.subr.mxu0 0.0
        %991 = vmatpush1.msra.mxu0 0.0
        %992 = vmatprep.subr.mxu0 0.0
        %993 = vmatpush1.msra.mxu0 0.0
        %994 = vmatprep.subr.mxu0 0.0
        %995 = vmatpush1.msra.mxu0 0.0
        %996 = vmatprep.subr.mxu0 0.0
        %997 = vmatpush1.msra.mxu0 0.0
        %998 = vmatprep.subr.mxu0 0.0
        %999 = vmatpush1.msra.mxu0 0.0
        %1000 = vmatprep.subr.mxu0 0.0
        %1001 = vmatpush1.msra.mxu0 %v953
        %1002 = vmatprep.subr.mxu0 0.0
        %1003 = vmatpush1.msra.mxu0 %v952
        %1004 = vmatprep.subr.mxu0 0.0
        %1005 = vmatpush1.msra.mxu0 %v951
        %1006 = vmatprep.subr.mxu0 0.0
        %1007 = vmatpush1.msra.mxu0 %v950
        %1008 = vmatprep.subr.mxu0 0.0
        %1009 = vmatpush1.msra.mxu0 %v949
        %1010 = vmatprep.subr.mxu0 0.0
        %1011 = vmatpush1.msra.mxu0 %v948
        %1012 = vmatprep.subr.mxu0 0.0
        %1013 = vmatpush1.msra.mxu0 %v947
        %1014 = vmatprep.subr.mxu0 0.0
        %1015 = vmatpush1.msra.mxu0 %v946
        %1016 = vmatprep.subr.mxu0 0.0
        %1017 = vmatpush2.msra.mxu0 0.0
        %1018 = vmatprep.subr.mxu0 0.0
        %1019 = vmatpush2.msra.mxu0 0.0
        %1020 = vmatprep.subr.mxu0 0.0
        %1021 = vmatpush2.msra.mxu0 0.0
        %1022 = vmatprep.subr.mxu0 0.0
        %1023 = vmatpush2.msra.mxu0 0.0
        %1024 = vmatprep.subr.mxu0 0.0
        %1025 = vmatpush2.msra.mxu0 0.0
        %1026 = vmatprep.subr.mxu0 0.0
        %1027 = vmatpush2.msra.mxu0 0.0
        %1028 = vmatprep.subr.mxu0 0.0
        %1029 = vmatpush2.msra.mxu0 0.0
        %1030 = vmatprep.subr.mxu0 0.0
        %1031 = vmatpush2.msra.mxu0 0.0
        %1032 = vmatprep.subr.mxu0 0.0
        %1033 = vmatpush2.msra.mxu0 0.0
        %1034 = vmatprep.subr.mxu0 0.0
        %1035 = vmatpush2.msra.mxu0 0.0
        %1036 = vmatprep.subr.mxu0 0.0
        %1037 = vmatpush2.msra.mxu0 0.0
        %1038 = vmatprep.subr.mxu0 0.0
        %1039 = vmatpush2.msra.mxu0 0.0
        %1040 = vmatprep.subr.mxu0 0.0
        %1041 = vmatpush2.msra.mxu0 0.0
        %1042 = vmatprep.subr.mxu0 0.0
        %1043 = vmatpush2.msra.mxu0 0.0
        %1044 = vmatprep.subr.mxu0 0.0
        %1045 = vmatpush2.msra.mxu0 0.0
        %1046 = vmatprep.subr.mxu0 0.0
        %1047 = vmatpush2.msra.mxu0 0.0
        %1048 = vmatprep.mubr.f32.mxu0 0.0
        %1049 = vmatmul.mubr.f32.gmra.mxu0 %v980
        %v1050 = vpop.f32.mrf.mxu0
        %v1051 = vadd.f32 0.0, %v1050
        %v1052 = vpop.f32.mrf.mxu0
        %1053 = vmatprep.mubr.f32.mxu0 0.0
        %1054 = vmatmul.mubr.f32.gmra.mxu0 %v982
        %v1055 = vpop.f32.mrf.mxu0
        %v1056 = vadd.f32 0.0, %v1055
        %v1057 = vpop.f32.mrf.mxu0
        %1058 = vdwg.mxu0
        %v1059 = vadd.f32 %v937, %v1051
        %v1060 = vadd.f32 %v938, %v1056
        %v1061 = vld [vmem:[#allocation2 + $0x20] sm:$0xfc]
        %v1062 = vld [vmem:[#allocation2 + $0x30] sm:$0xff]
        %v1063 = vld [vmem:[#allocation2 + $0x40] sm:$0x3]
        %s1064 = scalar_lea.vmem [#allocation8], 320
        %v1065 = vld [vmem:[%s1064] sm:$0xff]
        %v1066 = vld [vmem:[%s1064 + $0x8] sm:$0xff]
        %v1067 = vld [vmem:[%s1064 + $0x10] sm:$0xff]
        %v1068 = vld [vmem:[%s1064 + $0x18] sm:$0xff]
        %v1069 = vld [vmem:[%s1064 + $0x20] sm:$0xff]
        %v1070 = vld [vmem:[%s1064 + $0x28] sm:$0xff]
        %v1071 = vld [vmem:[%s1064 + $0x30] sm:$0xff]
        %v1072 = vld [vmem:[%s1064 + $0x38] sm:$0xff]
        %vm1076 = vcmask 1045504
        %v1077 = vrot.slane %v1061, 2
        %v1078 = vrot.slane %v1062, 2
        %v1079 = vsel %vm1076, %v1077, %v1078
        %v1080 = vrot.slane %v1063, 2
        %v1081 = vsel %vm1076, %v1078, %v1080
        %1082 = vrot.lane.b32.xlu0 %v1079, 104
        %v1083 = vpop.permute.xlu0 %1082
        %1084 = vrot.lane.b32.xlu0 %v1081, 104
        %v1085 = vpop.permute.xlu0 %1084
        %v1086 = vsel %vm297, %v1083, 0
        %v1088 = vsel %vm297, %v1085, 0
        %1090 = vmatprep.subr.mxu0 0.0
        %1091 = vmatpush1.msra.mxu0 0.0
        %1092 = vmatprep.subr.mxu0 0.0
        %1093 = vmatpush1.msra.mxu0 0.0
        %1094 = vmatprep.subr.mxu0 0.0
        %1095 = vmatpush1.msra.mxu0 0.0
        %1096 = vmatprep.subr.mxu0 0.0
        %1097 = vmatpush1.msra.mxu0 0.0
        %1098 = vmatprep.subr.mxu0 0.0
        %1099 = vmatpush1.msra.mxu0 0.0
        %1100 = vmatprep.subr.mxu0 0.0
        %1101 = vmatpush1.msra.mxu0 0.0
        %1102 = vmatprep.subr.mxu0 0.0
        %1103 = vmatpush1.msra.mxu0 0.0
        %1104 = vmatprep.subr.mxu0 0.0
        %1105 = vmatpush1.msra.mxu0 0.0
        %1106 = vmatprep.subr.mxu0 0.0
        %1107 = vmatpush1.msra.mxu0 %v1072
        %1108 = vmatprep.subr.mxu0 0.0
        %1109 = vmatpush1.msra.mxu0 %v1071
        %1110 = vmatprep.subr.mxu0 0.0
        %1111 = vmatpush1.msra.mxu0 %v1070
        %1112 = vmatprep.subr.mxu0 0.0
        %1113 = vmatpush1.msra.mxu0 %v1069
        %1114 = vmatprep.subr.mxu0 0.0
        %1115 = vmatpush1.msra.mxu0 %v1068
        %1116 = vmatprep.subr.mxu0 0.0
        %1117 = vmatpush1.msra.mxu0 %v1067
        %1118 = vmatprep.subr.mxu0 0.0
        %1119 = vmatpush1.msra.mxu0 %v1066
        %1120 = vmatprep.subr.mxu0 0.0
        %1121 = vmatpush1.msra.mxu0 %v1065
        %1122 = vmatprep.subr.mxu0 0.0
        %1123 = vmatpush2.msra.mxu0 0.0
        %1124 = vmatprep.subr.mxu0 0.0
        %1125 = vmatpush2.msra.mxu0 0.0
        %1126 = vmatprep.subr.mxu0 0.0
        %1127 = vmatpush2.msra.mxu0 0.0
        %1128 = vmatprep.subr.mxu0 0.0
        %1129 = vmatpush2.msra.mxu0 0.0
        %1130 = vmatprep.subr.mxu0 0.0
        %1131 = vmatpush2.msra.mxu0 0.0
        %1132 = vmatprep.subr.mxu0 0.0
        %1133 = vmatpush2.msra.mxu0 0.0
        %1134 = vmatprep.subr.mxu0 0.0
        %1135 = vmatpush2.msra.mxu0 0.0
        %1136 = vmatprep.subr.mxu0 0.0
        %1137 = vmatpush2.msra.mxu0 0.0
        %1138 = vmatprep.subr.mxu0 0.0
        %1139 = vmatpush2.msra.mxu0 0.0
        %1140 = vmatprep.subr.mxu0 0.0
        %1141 = vmatpush2.msra.mxu0 0.0
        %1142 = vmatprep.subr.mxu0 0.0
        %1143 = vmatpush2.msra.mxu0 0.0
        %1144 = vmatprep.subr.mxu0 0.0
        %1145 = vmatpush2.msra.mxu0 0.0
        %1146 = vmatprep.subr.mxu0 0.0
        %1147 = vmatpush2.msra.mxu0 0.0
        %1148 = vmatprep.subr.mxu0 0.0
        %1149 = vmatpush2.msra.mxu0 0.0
        %1150 = vmatprep.subr.mxu0 0.0
        %1151 = vmatpush2.msra.mxu0 0.0
        %1152 = vmatprep.subr.mxu0 0.0
        %1153 = vmatpush2.msra.mxu0 0.0
        %1154 = vmatprep.mubr.f32.mxu0 0.0
        %1155 = vmatmul.mubr.f32.gmra.mxu0 %v1086
        %v1156 = vpop.f32.mrf.mxu0
        %v1157 = vadd.f32 0.0, %v1156
        %v1158 = vpop.f32.mrf.mxu0
        %1159 = vmatprep.mubr.f32.mxu0 0.0
        %1160 = vmatmul.mubr.f32.gmra.mxu0 %v1088
        %v1161 = vpop.f32.mrf.mxu0
        %v1162 = vadd.f32 0.0, %v1161
        %v1163 = vpop.f32.mrf.mxu0
        %1164 = vdwg.mxu0
        %v1165 = vadd.f32 %v1059, %v1157
        %v1166 = vadd.f32 %v1060, %v1162
        %s1167 = scalar_lea.vmem [#allocation8], 384
        %v1168 = vld [vmem:[%s1167] sm:$0xff]
        %v1169 = vld [vmem:[%s1167 + $0x8] sm:$0xff]
        %v1170 = vld [vmem:[%s1167 + $0x10] sm:$0xff]
        %v1171 = vld [vmem:[%s1167 + $0x18] sm:$0xff]
        %v1172 = vld [vmem:[%s1167 + $0x20] sm:$0xff]
        %v1173 = vld [vmem:[%s1167 + $0x28] sm:$0xff]
        %v1174 = vld [vmem:[%s1167 + $0x30] sm:$0xff]
        %v1175 = vld [vmem:[%s1167 + $0x38] sm:$0xff]
        %1176 = vrot.lane.b32.xlu0 %v1079, 80
        %v1177 = vpop.permute.xlu0 %1176
        %1178 = vrot.lane.b32.xlu0 %v1081, 80
        %v1179 = vpop.permute.xlu0 %1178
        %v1180 = vsel %vm297, %v1177, 0
        %v1182 = vsel %vm297, %v1179, 0
        %1184 = vmatprep.subr.mxu0 0.0
        %1185 = vmatpush1.msra.mxu0 0.0
        %1186 = vmatprep.subr.mxu0 0.0
        %1187 = vmatpush1.msra.mxu0 0.0
        %1188 = vmatprep.subr.mxu0 0.0
        %1189 = vmatpush1.msra.mxu0 0.0
        %1190 = vmatprep.subr.mxu0 0.0
        %1191 = vmatpush1.msra.mxu0 0.0
        %1192 = vmatprep.subr.mxu0 0.0
        %1193 = vmatpush1.msra.mxu0 0.0
        %1194 = vmatprep.subr.mxu0 0.0
        %1195 = vmatpush1.msra.mxu0 0.0
        %1196 = vmatprep.subr.mxu0 0.0
        %1197 = vmatpush1.msra.mxu0 0.0
        %1198 = vmatprep.subr.mxu0 0.0
        %1199 = vmatpush1.msra.mxu0 0.0
        %1200 = vmatprep.subr.mxu0 0.0
        %1201 = vmatpush1.msra.mxu0 %v1175
        %1202 = vmatprep.subr.mxu0 0.0
        %1203 = vmatpush1.msra.mxu0 %v1174
        %1204 = vmatprep.subr.mxu0 0.0
        %1205 = vmatpush1.msra.mxu0 %v1173
        %1206 = vmatprep.subr.mxu0 0.0
        %1207 = vmatpush1.msra.mxu0 %v1172
        %1208 = vmatprep.subr.mxu0 0.0
        %1209 = vmatpush1.msra.mxu0 %v1171
        %1210 = vmatprep.subr.mxu0 0.0
        %1211 = vmatpush1.msra.mxu0 %v1170
        %1212 = vmatprep.subr.mxu0 0.0
        %1213 = vmatpush1.msra.mxu0 %v1169
        %1214 = vmatprep.subr.mxu0 0.0
        %1215 = vmatpush1.msra.mxu0 %v1168
        %1216 = vmatprep.subr.mxu0 0.0
        %1217 = vmatpush2.msra.mxu0 0.0
        %1218 = vmatprep.subr.mxu0 0.0
        %1219 = vmatpush2.msra.mxu0 0.0
        %1220 = vmatprep.subr.mxu0 0.0
        %1221 = vmatpush2.msra.mxu0 0.0
        %1222 = vmatprep.subr.mxu0 0.0
        %1223 = vmatpush2.msra.mxu0 0.0
        %1224 = vmatprep.subr.mxu0 0.0
        %1225 = vmatpush2.msra.mxu0 0.0
        %1226 = vmatprep.subr.mxu0 0.0
        %1227 = vmatpush2.msra.mxu0 0.0
        %1228 = vmatprep.subr.mxu0 0.0
        %1229 = vmatpush2.msra.mxu0 0.0
        %1230 = vmatprep.subr.mxu0 0.0
        %1231 = vmatpush2.msra.mxu0 0.0
        %1232 = vmatprep.subr.mxu0 0.0
        %1233 = vmatpush2.msra.mxu0 0.0
        %1234 = vmatprep.subr.mxu0 0.0
        %1235 = vmatpush2.msra.mxu0 0.0
        %1236 = vmatprep.subr.mxu0 0.0
        %1237 = vmatpush2.msra.mxu0 0.0
        %1238 = vmatprep.subr.mxu0 0.0
        %1239 = vmatpush2.msra.mxu0 0.0
        %1240 = vmatprep.subr.mxu0 0.0
        %1241 = vmatpush2.msra.mxu0 0.0
        %1242 = vmatprep.subr.mxu0 0.0
        %1243 = vmatpush2.msra.mxu0 0.0
        %1244 = vmatprep.subr.mxu0 0.0
        %1245 = vmatpush2.msra.mxu0 0.0
        %1246 = vmatprep.subr.mxu0 0.0
        %1247 = vmatpush2.msra.mxu0 0.0
        %1248 = vmatprep.mubr.f32.mxu0 0.0
        %1249 = vmatmul.mubr.f32.gmra.mxu0 %v1180
        %v1250 = vpop.f32.mrf.mxu0
        %v1251 = vadd.f32 0.0, %v1250
        %v1252 = vpop.f32.mrf.mxu0
        %1253 = vmatprep.mubr.f32.mxu0 0.0
        %1254 = vmatmul.mubr.f32.gmra.mxu0 %v1182
        %v1255 = vpop.f32.mrf.mxu0
        %v1256 = vadd.f32 0.0, %v1255
        %v1257 = vpop.f32.mrf.mxu0
        %1258 = vdwg.mxu0
        %v1259 = vadd.f32 %v1165, %v1251
        %v1260 = vadd.f32 %v1166, %v1256
        %v1261 = vld [vmem:[#allocation2 + $0x20] sm:$0xfc]
        %v1262 = vld [vmem:[#allocation2 + $0x28] sm:$0xfc]
        %v1263 = vld [vmem:[#allocation2 + $0x30] sm:$0xff]
        %v1264 = vld [vmem:[#allocation2 + $0x38] sm:$0xff]
        %v1265 = vld [vmem:[#allocation2 + $0x40] sm:$0x3]
        %v1266 = vld [vmem:[#allocation2 + $0x48] sm:$0x3]
        %s1267 = scalar_lea.vmem [#allocation8], 448
        %v1268 = vld [vmem:[%s1267] sm:$0xff]
        %v1269 = vld [vmem:[%s1267 + $0x8] sm:$0xff]
        %v1270 = vld [vmem:[%s1267 + $0x10] sm:$0xff]
        %v1271 = vld [vmem:[%s1267 + $0x18] sm:$0xff]
        %v1272 = vld [vmem:[%s1267 + $0x20] sm:$0xff]
        %v1273 = vld [vmem:[%s1267 + $0x28] sm:$0xff]
        %v1274 = vld [vmem:[%s1267 + $0x30] sm:$0xff]
        %v1275 = vld [vmem:[%s1267 + $0x38] sm:$0xff]
        %v1282 = vrot.slane %v1261, 2
        %v1283 = vrot.slane %v1263, 2
        %v1284 = vsel %vm1076, %v1282, %v1283
        %v1285 = vrot.slane %v1262, 2
        %v1286 = vrot.slane %v1264, 2
        %v1287 = vsel %vm1076, %v1285, %v1286
        %v1288 = vrot.slane %v1265, 2
        %v1289 = vsel %vm1076, %v1283, %v1288
        %v1290 = vrot.slane %v1266, 2
        %v1291 = vsel %vm1076, %v1286, %v1290
        %1292 = vrot.lane.b32.xlu0 %v1284, 56
        %v1293 = vpop.permute.xlu0 %1292
        %1294 = vrot.lane.b32.xlu0 %v1287, 56
        %v1295 = vpop.permute.xlu0 %1294
        %1296 = vrot.lane.b32.xlu0 %v1289, 56
        %v1297 = vpop.permute.xlu0 %1296
        %1298 = vrot.lane.b32.xlu0 %v1291, 56
        %v1299 = vpop.permute.xlu0 %1298
        %v1300 = vsel %vm750, %v1293, %v1295
        %v1301 = vsel %vm750, %v1297, %v1299
        %v1302 = vsel %vm297, %v1300, 0
        %v1304 = vsel %vm297, %v1301, 0
        %1306 = vmatprep.subr.mxu0 0.0
        %1307 = vmatpush1.msra.mxu0 0.0
        %1308 = vmatprep.subr.mxu0 0.0
        %1309 = vmatpush1.msra.mxu0 0.0
        %1310 = vmatprep.subr.mxu0 0.0
        %1311 = vmatpush1.msra.mxu0 0.0
        %1312 = vmatprep.subr.mxu0 0.0
        %1313 = vmatpush1.msra.mxu0 0.0
        %1314 = vmatprep.subr.mxu0 0.0
        %1315 = vmatpush1.msra.mxu0 0.0
        %1316 = vmatprep.subr.mxu0 0.0
        %1317 = vmatpush1.msra.mxu0 0.0
        %1318 = vmatprep.subr.mxu0 0.0
        %1319 = vmatpush1.msra.mxu0 0.0
        %1320 = vmatprep.subr.mxu0 0.0
        %1321 = vmatpush1.msra.mxu0 0.0
        %1322 = vmatprep.subr.mxu0 0.0
        %1323 = vmatpush1.msra.mxu0 %v1275
        %1324 = vmatprep.subr.mxu0 0.0
        %1325 = vmatpush1.msra.mxu0 %v1274
        %1326 = vmatprep.subr.mxu0 0.0
        %1327 = vmatpush1.msra.mxu0 %v1273
        %1328 = vmatprep.subr.mxu0 0.0
        %1329 = vmatpush1.msra.mxu0 %v1272
        %1330 = vmatprep.subr.mxu0 0.0
        %1331 = vmatpush1.msra.mxu0 %v1271
        %1332 = vmatprep.subr.mxu0 0.0
        %1333 = vmatpush1.msra.mxu0 %v1270
        %1334 = vmatprep.subr.mxu0 0.0
        %1335 = vmatpush1.msra.mxu0 %v1269
        %1336 = vmatprep.subr.mxu0 0.0
        %1337 = vmatpush1.msra.mxu0 %v1268
        %1338 = vmatprep.subr.mxu0 0.0
        %1339 = vmatpush2.msra.mxu0 0.0
        %1340 = vmatprep.subr.mxu0 0.0
        %1341 = vmatpush2.msra.mxu0 0.0
        %1342 = vmatprep.subr.mxu0 0.0
        %1343 = vmatpush2.msra.mxu0 0.0
        %1344 = vmatprep.subr.mxu0 0.0
        %1345 = vmatpush2.msra.mxu0 0.0
        %1346 = vmatprep.subr.mxu0 0.0
        %1347 = vmatpush2.msra.mxu0 0.0
        %1348 = vmatprep.subr.mxu0 0.0
        %1349 = vmatpush2.msra.mxu0 0.0
        %1350 = vmatprep.subr.mxu0 0.0
        %1351 = vmatpush2.msra.mxu0 0.0
        %1352 = vmatprep.subr.mxu0 0.0
        %1353 = vmatpush2.msra.mxu0 0.0
        %1354 = vmatprep.subr.mxu0 0.0
        %1355 = vmatpush2.msra.mxu0 0.0
        %1356 = vmatprep.subr.mxu0 0.0
        %1357 = vmatpush2.msra.mxu0 0.0
        %1358 = vmatprep.subr.mxu0 0.0
        %1359 = vmatpush2.msra.mxu0 0.0
        %1360 = vmatprep.subr.mxu0 0.0
        %1361 = vmatpush2.msra.mxu0 0.0
        %1362 = vmatprep.subr.mxu0 0.0
        %1363 = vmatpush2.msra.mxu0 0.0
        %1364 = vmatprep.subr.mxu0 0.0
        %1365 = vmatpush2.msra.mxu0 0.0
        %1366 = vmatprep.subr.mxu0 0.0
        %1367 = vmatpush2.msra.mxu0 0.0
        %1368 = vmatprep.subr.mxu0 0.0
        %1369 = vmatpush2.msra.mxu0 0.0
        %1370 = vmatprep.mubr.f32.mxu0 0.0
        %1371 = vmatmul.mubr.f32.gmra.mxu0 %v1302
        %v1372 = vpop.f32.mrf.mxu0
        %v1373 = vadd.f32 0.0, %v1372
        %v1374 = vpop.f32.mrf.mxu0
        %1375 = vmatprep.mubr.f32.mxu0 0.0
        %1376 = vmatmul.mubr.f32.gmra.mxu0 %v1304
        %v1377 = vpop.f32.mrf.mxu0
        %v1378 = vadd.f32 0.0, %v1377
        %v1379 = vpop.f32.mrf.mxu0
        %1380 = vdwg.mxu0
        %v1381 = vadd.f32 %v1259, %v1373
        %v1382 = vadd.f32 %v1260, %v1378
        %v1383 = vld [vmem:[#allocation2] sm:$0xff]
        %v1384 = vld [vmem:[#allocation2 + $0x10] sm:$0xff]
        %s1385 = scalar_lea.vmem [#allocation8], 512
        %v1386 = vld [vmem:[%s1385] sm:$0xff]
        %v1387 = vld [vmem:[%s1385 + $0x8] sm:$0xff]
        %v1388 = vld [vmem:[%s1385 + $0x10] sm:$0xff]
        %v1389 = vld [vmem:[%s1385 + $0x18] sm:$0xff]
        %v1390 = vld [vmem:[%s1385 + $0x20] sm:$0xff]
        %v1391 = vld [vmem:[%s1385 + $0x28] sm:$0xff]
        %v1392 = vld [vmem:[%s1385 + $0x30] sm:$0xff]
        %v1393 = vld [vmem:[%s1385 + $0x38] sm:$0xff]
        %v1395 = vsel %vm297, %v1383, 0
        %v1398 = vsel %vm297, %v1384, 0
        %1400 = vmatprep.subr.mxu0 0.0
        %1401 = vmatpush1.msra.mxu0 0.0
        %1402 = vmatprep.subr.mxu0 0.0
        %1403 = vmatpush1.msra.mxu0 0.0
        %1404 = vmatprep.subr.mxu0 0.0
        %1405 = vmatpush1.msra.mxu0 0.0
        %1406 = vmatprep.subr.mxu0 0.0
        %1407 = vmatpush1.msra.mxu0 0.0
        %1408 = vmatprep.subr.mxu0 0.0
        %1409 = vmatpush1.msra.mxu0 0.0
        %1410 = vmatprep.subr.mxu0 0.0
        %1411 = vmatpush1.msra.mxu0 0.0
        %1412 = vmatprep.subr.mxu0 0.0
        %1413 = vmatpush1.msra.mxu0 0.0
        %1414 = vmatprep.subr.mxu0 0.0
        %1415 = vmatpush1.msra.mxu0 0.0
        %1416 = vmatprep.subr.mxu0 0.0
        %1417 = vmatpush1.msra.mxu0 %v1393
        %1418 = vmatprep.subr.mxu0 0.0
        %1419 = vmatpush1.msra.mxu0 %v1392
        %1420 = vmatprep.subr.mxu0 0.0
        %1421 = vmatpush1.msra.mxu0 %v1391
        %1422 = vmatprep.subr.mxu0 0.0
        %1423 = vmatpush1.msra.mxu0 %v1390
        %1424 = vmatprep.subr.mxu0 0.0
        %1425 = vmatpush1.msra.mxu0 %v1389
        %1426 = vmatprep.subr.mxu0 0.0
        %1427 = vmatpush1.msra.mxu0 %v1388
        %1428 = vmatprep.subr.mxu0 0.0
        %1429 = vmatpush1.msra.mxu0 %v1387
        %1430 = vmatprep.subr.mxu0 0.0
        %1431 = vmatpush1.msra.mxu0 %v1386
        %1432 = vmatprep.subr.mxu0 0.0
        %1433 = vmatpush2.msra.mxu0 0.0
        %1434 = vmatprep.subr.mxu0 0.0
        %1435 = vmatpush2.msra.mxu0 0.0
        %1436 = vmatprep.subr.mxu0 0.0
        %1437 = vmatpush2.msra.mxu0 0.0
        %1438 = vmatprep.subr.mxu0 0.0
        %1439 = vmatpush2.msra.mxu0 0.0
        %1440 = vmatprep.subr.mxu0 0.0
        %1441 = vmatpush2.msra.mxu0 0.0
        %1442 = vmatprep.subr.mxu0 0.0
        %1443 = vmatpush2.msra.mxu0 0.0
        %1444 = vmatprep.subr.mxu0 0.0
        %1445 = vmatpush2.msra.mxu0 0.0
        %1446 = vmatprep.subr.mxu0 0.0
        %1447 = vmatpush2.msra.mxu0 0.0
        %1448 = vmatprep.subr.mxu0 0.0
        %1449 = vmatpush2.msra.mxu0 0.0
        %1450 = vmatprep.subr.mxu0 0.0
        %1451 = vmatpush2.msra.mxu0 0.0
        %1452 = vmatprep.subr.mxu0 0.0
        %1453 = vmatpush2.msra.mxu0 0.0
        %1454 = vmatprep.subr.mxu0 0.0
        %1455 = vmatpush2.msra.mxu0 0.0
        %1456 = vmatprep.subr.mxu0 0.0
        %1457 = vmatpush2.msra.mxu0 0.0
        %1458 = vmatprep.subr.mxu0 0.0
        %1459 = vmatpush2.msra.mxu0 0.0
        %1460 = vmatprep.subr.mxu0 0.0
        %1461 = vmatpush2.msra.mxu0 0.0
        %1462 = vmatprep.subr.mxu0 0.0
        %1463 = vmatpush2.msra.mxu0 0.0
        %1464 = vmatprep.mubr.f32.mxu0 0.0
        %1465 = vmatmul.mubr.f32.gmra.mxu0 %v1395
        %v1466 = vpop.f32.mrf.mxu0
        %v1467 = vadd.f32 0.0, %v1466
        %v1468 = vpop.f32.mrf.mxu0
        %1469 = vmatprep.mubr.f32.mxu0 0.0
        %1470 = vmatmul.mubr.f32.gmra.mxu0 %v1398
        %v1471 = vpop.f32.mrf.mxu0
        %v1472 = vadd.f32 0.0, %v1471
        %v1473 = vpop.f32.mrf.mxu0
        %1474 = vdwg.mxu0
        %v1475 = vadd.f32 %v1381, %v1467
        %v1476 = vadd.f32 %v1382, %v1472
        %s1477 = scalar_lea.vmem [#allocation8], 576
        %v1478 = vld [vmem:[%s1477] sm:$0xff]
        %v1479 = vld [vmem:[%s1477 + $0x8] sm:$0xff]
        %v1480 = vld [vmem:[%s1477 + $0x10] sm:$0xff]
        %v1481 = vld [vmem:[%s1477 + $0x18] sm:$0xff]
        %v1482 = vld [vmem:[%s1477 + $0x20] sm:$0xff]
        %v1483 = vld [vmem:[%s1477 + $0x28] sm:$0xff]
        %v1484 = vld [vmem:[%s1477 + $0x30] sm:$0xff]
        %v1485 = vld [vmem:[%s1477 + $0x38] sm:$0xff]
        %1486 = vrot.lane.b32.xlu0 %v1383, 80
        %v1487 = vpop.permute.xlu0 %1486
        %1488 = vrot.lane.b32.xlu0 %v1384, 80
        %v1489 = vpop.permute.xlu0 %1488
        %v1490 = vsel %vm297, %v1487, 0
        %v1492 = vsel %vm297, %v1489, 0
        %1494 = vmatprep.subr.mxu0 0.0
        %1495 = vmatpush1.msra.mxu0 0.0
        %1496 = vmatprep.subr.mxu0 0.0
        %1497 = vmatpush1.msra.mxu0 0.0
        %1498 = vmatprep.subr.mxu0 0.0
        %1499 = vmatpush1.msra.mxu0 0.0
        %1500 = vmatprep.subr.mxu0 0.0
        %1501 = vmatpush1.msra.mxu0 0.0
        %1502 = vmatprep.subr.mxu0 0.0
        %1503 = vmatpush1.msra.mxu0 0.0
        %1504 = vmatprep.subr.mxu0 0.0
        %1505 = vmatpush1.msra.mxu0 0.0
        %1506 = vmatprep.subr.mxu0 0.0
        %1507 = vmatpush1.msra.mxu0 0.0
        %1508 = vmatprep.subr.mxu0 0.0
        %1509 = vmatpush1.msra.mxu0 0.0
        %1510 = vmatprep.subr.mxu0 0.0
        %1511 = vmatpush1.msra.mxu0 %v1485
        %1512 = vmatprep.subr.mxu0 0.0
        %1513 = vmatpush1.msra.mxu0 %v1484
        %1514 = vmatprep.subr.mxu0 0.0
        %1515 = vmatpush1.msra.mxu0 %v1483
        %1516 = vmatprep.subr.mxu0 0.0
        %1517 = vmatpush1.msra.mxu0 %v1482
        %1518 = vmatprep.subr.mxu0 0.0
        %1519 = vmatpush1.msra.mxu0 %v1481
        %1520 = vmatprep.subr.mxu0 0.0
        %1521 = vmatpush1.msra.mxu0 %v1480
        %1522 = vmatprep.subr.mxu0 0.0
        %1523 = vmatpush1.msra.mxu0 %v1479
        %1524 = vmatprep.subr.mxu0 0.0
        %1525 = vmatpush1.msra.mxu0 %v1478
        %1526 = vmatprep.subr.mxu0 0.0
        %1527 = vmatpush2.msra.mxu0 0.0
        %1528 = vmatprep.subr.mxu0 0.0
        %1529 = vmatpush2.msra.mxu0 0.0
        %1530 = vmatprep.subr.mxu0 0.0
        %1531 = vmatpush2.msra.mxu0 0.0
        %1532 = vmatprep.subr.mxu0 0.0
        %1533 = vmatpush2.msra.mxu0 0.0
        %1534 = vmatprep.subr.mxu0 0.0
        %1535 = vmatpush2.msra.mxu0 0.0
        %1536 = vmatprep.subr.mxu0 0.0
        %1537 = vmatpush2.msra.mxu0 0.0
        %1538 = vmatprep.subr.mxu0 0.0
        %1539 = vmatpush2.msra.mxu0 0.0
        %1540 = vmatprep.subr.mxu0 0.0
        %1541 = vmatpush2.msra.mxu0 0.0
        %1542 = vmatprep.subr.mxu0 0.0
        %1543 = vmatpush2.msra.mxu0 0.0
        %1544 = vmatprep.subr.mxu0 0.0
        %1545 = vmatpush2.msra.mxu0 0.0
        %1546 = vmatprep.subr.mxu0 0.0
        %1547 = vmatpush2.msra.mxu0 0.0
        %1548 = vmatprep.subr.mxu0 0.0
        %1549 = vmatpush2.msra.mxu0 0.0
        %1550 = vmatprep.subr.mxu0 0.0
        %1551 = vmatpush2.msra.mxu0 0.0
        %1552 = vmatprep.subr.mxu0 0.0
        %1553 = vmatpush2.msra.mxu0 0.0
        %1554 = vmatprep.subr.mxu0 0.0
        %1555 = vmatpush2.msra.mxu0 0.0
        %1556 = vmatprep.subr.mxu0 0.0
        %1557 = vmatpush2.msra.mxu0 0.0
        %1558 = vmatprep.mubr.f32.mxu0 0.0
        %1559 = vmatmul.mubr.f32.gmra.mxu0 %v1490
        %v1560 = vpop.f32.mrf.mxu0
        %v1561 = vadd.f32 0.0, %v1560
        %v1562 = vpop.f32.mrf.mxu0
        %1563 = vmatprep.mubr.f32.mxu0 0.0
        %1564 = vmatmul.mubr.f32.gmra.mxu0 %v1492
        %v1565 = vpop.f32.mrf.mxu0
        %v1566 = vadd.f32 0.0, %v1565
        %v1567 = vpop.f32.mrf.mxu0
        %1568 = vdwg.mxu0
        %v1569 = vadd.f32 %v1475, %v1561
        %v1570 = vadd.f32 %v1476, %v1566
        %v1571 = vld [vmem:[#allocation2] sm:$0xff]
        %v1572 = vld [vmem:[#allocation2 + $0x8] sm:$0xff]
        %v1573 = vld [vmem:[#allocation2 + $0x10] sm:$0xff]
        %v1574 = vld [vmem:[#allocation2 + $0x18] sm:$0xff]
        %s1575 = scalar_lea.vmem [#allocation8], 640
        %v1576 = vld [vmem:[%s1575] sm:$0xff]
        %v1577 = vld [vmem:[%s1575 + $0x8] sm:$0xff]
        %v1578 = vld [vmem:[%s1575 + $0x10] sm:$0xff]
        %v1579 = vld [vmem:[%s1575 + $0x18] sm:$0xff]
        %v1580 = vld [vmem:[%s1575 + $0x20] sm:$0xff]
        %v1581 = vld [vmem:[%s1575 + $0x28] sm:$0xff]
        %v1582 = vld [vmem:[%s1575 + $0x30] sm:$0xff]
        %v1583 = vld [vmem:[%s1575 + $0x38] sm:$0xff]
        %1588 = vrot.lane.b32.xlu0 %v1571, 32
        %v1589 = vpop.permute.xlu0 %1588
        %1590 = vrot.lane.b32.xlu0 %v1572, 32
        %v1591 = vpop.permute.xlu0 %1590
        %1592 = vrot.lane.b32.xlu0 %v1573, 32
        %v1593 = vpop.permute.xlu0 %1592
        %1594 = vrot.lane.b32.xlu0 %v1574, 32
        %v1595 = vpop.permute.xlu0 %1594
        %v1596 = vsel %vm483, %v1589, %v1591
        %v1597 = vsel %vm483, %v1593, %v1595
        %v1598 = vsel %vm297, %v1596, 0
        %v1600 = vsel %vm297, %v1597, 0
        %1602 = vmatprep.subr.mxu0 0.0
        %1603 = vmatpush1.msra.mxu0 0.0
        %1604 = vmatprep.subr.mxu0 0.0
        %1605 = vmatpush1.msra.mxu0 0.0
        %1606 = vmatprep.subr.mxu0 0.0
        %1607 = vmatpush1.msra.mxu0 0.0
        %1608 = vmatprep.subr.mxu0 0.0
        %1609 = vmatpush1.msra.mxu0 0.0
        %1610 = vmatprep.subr.mxu0 0.0
        %1611 = vmatpush1.msra.mxu0 0.0
        %1612 = vmatprep.subr.mxu0 0.0
        %1613 = vmatpush1.msra.mxu0 0.0
        %1614 = vmatprep.subr.mxu0 0.0
        %1615 = vmatpush1.msra.mxu0 0.0
        %1616 = vmatprep.subr.mxu0 0.0
        %1617 = vmatpush1.msra.mxu0 0.0
        %1618 = vmatprep.subr.mxu0 0.0
        %1619 = vmatpush1.msra.mxu0 %v1583
        %1620 = vmatprep.subr.mxu0 0.0
        %1621 = vmatpush1.msra.mxu0 %v1582
        %1622 = vmatprep.subr.mxu0 0.0
        %1623 = vmatpush1.msra.mxu0 %v1581
        %1624 = vmatprep.subr.mxu0 0.0
        %1625 = vmatpush1.msra.mxu0 %v1580
        %1626 = vmatprep.subr.mxu0 0.0
        %1627 = vmatpush1.msra.mxu0 %v1579
        %1628 = vmatprep.subr.mxu0 0.0
        %1629 = vmatpush1.msra.mxu0 %v1578
        %1630 = vmatprep.subr.mxu0 0.0
        %1631 = vmatpush1.msra.mxu0 %v1577
        %1632 = vmatprep.subr.mxu0 0.0
        %1633 = vmatpush1.msra.mxu0 %v1576
        %1634 = vmatprep.subr.mxu0 0.0
        %1635 = vmatpush2.msra.mxu0 0.0
        %1636 = vmatprep.subr.mxu0 0.0
        %1637 = vmatpush2.msra.mxu0 0.0
        %1638 = vmatprep.subr.mxu0 0.0
        %1639 = vmatpush2.msra.mxu0 0.0
        %1640 = vmatprep.subr.mxu0 0.0
        %1641 = vmatpush2.msra.mxu0 0.0
        %1642 = vmatprep.subr.mxu0 0.0
        %1643 = vmatpush2.msra.mxu0 0.0
        %1644 = vmatprep.subr.mxu0 0.0
        %1645 = vmatpush2.msra.mxu0 0.0
        %1646 = vmatprep.subr.mxu0 0.0
        %1647 = vmatpush2.msra.mxu0 0.0
        %1648 = vmatprep.subr.mxu0 0.0
        %1649 = vmatpush2.msra.mxu0 0.0
        %1650 = vmatprep.subr.mxu0 0.0
        %1651 = vmatpush2.msra.mxu0 0.0
        %1652 = vmatprep.subr.mxu0 0.0
        %1653 = vmatpush2.msra.mxu0 0.0
        %1654 = vmatprep.subr.mxu0 0.0
        %1655 = vmatpush2.msra.mxu0 0.0
        %1656 = vmatprep.subr.mxu0 0.0
        %1657 = vmatpush2.msra.mxu0 0.0
        %1658 = vmatprep.subr.mxu0 0.0
        %1659 = vmatpush2.msra.mxu0 0.0
        %1660 = vmatprep.subr.mxu0 0.0
        %1661 = vmatpush2.msra.mxu0 0.0
        %1662 = vmatprep.subr.mxu0 0.0
        %1663 = vmatpush2.msra.mxu0 0.0
        %1664 = vmatprep.subr.mxu0 0.0
        %1665 = vmatpush2.msra.mxu0 0.0
        %1666 = vmatprep.mubr.f32.mxu0 0.0
        %1667 = vmatmul.mubr.f32.gmra.mxu0 %v1598
        %v1668 = vpop.f32.mrf.mxu0
        %v1669 = vadd.f32 0.0, %v1668
        %v1670 = vpop.f32.mrf.mxu0
        %1671 = vmatprep.mubr.f32.mxu0 0.0
        %1672 = vmatmul.mubr.f32.gmra.mxu0 %v1600
        %v1673 = vpop.f32.mrf.mxu0
        %v1674 = vadd.f32 0.0, %v1673
        %v1675 = vpop.f32.mrf.mxu0
        %1676 = vdwg.mxu0
        %v1677 = vadd.f32 %v1569, %v1669
        %v1678 = vadd.f32 %v1570, %v1674
        %s1679 = scalar_lea.vmem [#allocation8], 704
        %v1680 = vld [vmem:[%s1679] sm:$0xff]
        %v1681 = vld [vmem:[%s1679 + $0x8] sm:$0xff]
        %v1682 = vld [vmem:[%s1679 + $0x10] sm:$0xff]
        %v1683 = vld [vmem:[%s1679 + $0x18] sm:$0xff]
        %v1684 = vld [vmem:[%s1679 + $0x20] sm:$0xff]
        %v1685 = vld [vmem:[%s1679 + $0x28] sm:$0xff]
        %v1686 = vld [vmem:[%s1679 + $0x30] sm:$0xff]
        %v1687 = vld [vmem:[%s1679 + $0x38] sm:$0xff]
        %v1688 = vsel %vm297, %v851, 0
        %v1690 = vsel %vm297, %v853, 0
        %1692 = vmatprep.subr.mxu0 0.0
        %1693 = vmatpush1.msra.mxu0 0.0
        %1694 = vmatprep.subr.mxu0 0.0
        %1695 = vmatpush1.msra.mxu0 0.0
        %1696 = vmatprep.subr.mxu0 0.0
        %1697 = vmatpush1.msra.mxu0 0.0
        %1698 = vmatprep.subr.mxu0 0.0
        %1699 = vmatpush1.msra.mxu0 0.0
        %1700 = vmatprep.subr.mxu0 0.0
        %1701 = vmatpush1.msra.mxu0 0.0
        %1702 = vmatprep.subr.mxu0 0.0
        %1703 = vmatpush1.msra.mxu0 0.0
        %1704 = vmatprep.subr.mxu0 0.0
        %1705 = vmatpush1.msra.mxu0 0.0
        %1706 = vmatprep.subr.mxu0 0.0
        %1707 = vmatpush1.msra.mxu0 0.0
        %1708 = vmatprep.subr.mxu0 0.0
        %1709 = vmatpush1.msra.mxu0 %v1687
        %1710 = vmatprep.subr.mxu0 0.0
        %1711 = vmatpush1.msra.mxu0 %v1686
        %1712 = vmatprep.subr.mxu0 0.0
        %1713 = vmatpush1.msra.mxu0 %v1685
        %1714 = vmatprep.subr.mxu0 0.0
        %1715 = vmatpush1.msra.mxu0 %v1684
        %1716 = vmatprep.subr.mxu0 0.0
        %1717 = vmatpush1.msra.mxu0 %v1683
        %1718 = vmatprep.subr.mxu0 0.0
        %1719 = vmatpush1.msra.mxu0 %v1682
        %1720 = vmatprep.subr.mxu0 0.0
        %1721 = vmatpush1.msra.mxu0 %v1681
        %1722 = vmatprep.subr.mxu0 0.0
        %1723 = vmatpush1.msra.mxu0 %v1680
        %1724 = vmatprep.subr.mxu0 0.0
        %1725 = vmatpush2.msra.mxu0 0.0
        %1726 = vmatprep.subr.mxu0 0.0
        %1727 = vmatpush2.msra.mxu0 0.0
        %1728 = vmatprep.subr.mxu0 0.0
        %1729 = vmatpush2.msra.mxu0 0.0
        %1730 = vmatprep.subr.mxu0 0.0
        %1731 = vmatpush2.msra.mxu0 0.0
        %1732 = vmatprep.subr.mxu0 0.0
        %1733 = vmatpush2.msra.mxu0 0.0
        %1734 = vmatprep.subr.mxu0 0.0
        %1735 = vmatpush2.msra.mxu0 0.0
        %1736 = vmatprep.subr.mxu0 0.0
        %1737 = vmatpush2.msra.mxu0 0.0
        %1738 = vmatprep.subr.mxu0 0.0
        %1739 = vmatpush2.msra.mxu0 0.0
        %1740 = vmatprep.subr.mxu0 0.0
        %1741 = vmatpush2.msra.mxu0 0.0
        %1742 = vmatprep.subr.mxu0 0.0
        %1743 = vmatpush2.msra.mxu0 0.0
        %1744 = vmatprep.subr.mxu0 0.0
        %1745 = vmatpush2.msra.mxu0 0.0
        %1746 = vmatprep.subr.mxu0 0.0
        %1747 = vmatpush2.msra.mxu0 0.0
        %1748 = vmatprep.subr.mxu0 0.0
        %1749 = vmatpush2.msra.mxu0 0.0
        %1750 = vmatprep.subr.mxu0 0.0
        %1751 = vmatpush2.msra.mxu0 0.0
        %1752 = vmatprep.subr.mxu0 0.0
        %1753 = vmatpush2.msra.mxu0 0.0
        %1754 = vmatprep.subr.mxu0 0.0
        %1755 = vmatpush2.msra.mxu0 0.0
        %1756 = vmatprep.mubr.f32.mxu0 0.0
        %1757 = vmatmul.mubr.f32.gmra.mxu0 %v1688
        %v1758 = vpop.f32.mrf.mxu0
        %v1759 = vadd.f32 0.0, %v1758
        %v1760 = vpop.f32.mrf.mxu0
        %1761 = vmatprep.mubr.f32.mxu0 0.0
        %1762 = vmatmul.mubr.f32.gmra.mxu0 %v1690
        %v1763 = vpop.f32.mrf.mxu0
        %v1764 = vadd.f32 0.0, %v1763
        %v1765 = vpop.f32.mrf.mxu0
        %1766 = vdwg.mxu0
        %v1767 = vadd.f32 %v1677, %v1759
        %v1768 = vadd.f32 %v1678, %v1764
        %s1769 = scalar_lea.vmem [#allocation8], 768
        %v1770 = vld [vmem:[%s1769] sm:$0xff]
        %v1771 = vld [vmem:[%s1769 + $0x8] sm:$0xff]
        %v1772 = vld [vmem:[%s1769 + $0x10] sm:$0xff]
        %v1773 = vld [vmem:[%s1769 + $0x18] sm:$0xff]
        %v1774 = vld [vmem:[%s1769 + $0x20] sm:$0xff]
        %v1775 = vld [vmem:[%s1769 + $0x28] sm:$0xff]
        %v1776 = vld [vmem:[%s1769 + $0x30] sm:$0xff]
        %v1777 = vld [vmem:[%s1769 + $0x38] sm:$0xff]
        %1778 = vrot.lane.b32.xlu0 %v962, 32
        %v1779 = vpop.permute.xlu0 %1778
        %1780 = vrot.lane.b32.xlu0 %v965, 32
        %v1781 = vpop.permute.xlu0 %1780
        %1782 = vrot.lane.b32.xlu0 %v967, 32
        %v1783 = vpop.permute.xlu0 %1782
        %1784 = vrot.lane.b32.xlu0 %v969, 32
        %v1785 = vpop.permute.xlu0 %1784
        %v1786 = vsel %vm483, %v1779, %v1781
        %v1787 = vsel %vm483, %v1783, %v1785
        %v1788 = vsel %vm297, %v1786, 0
        %v1790 = vsel %vm297, %v1787, 0
        %1792 = vmatprep.subr.mxu0 0.0
        %1793 = vmatpush1.msra.mxu0 0.0
        %1794 = vmatprep.subr.mxu0 0.0
        %1795 = vmatpush1.msra.mxu0 0.0
        %1796 = vmatprep.subr.mxu0 0.0
        %1797 = vmatpush1.msra.mxu0 0.0
        %1798 = vmatprep.subr.mxu0 0.0
        %1799 = vmatpush1.msra.mxu0 0.0
        %1800 = vmatprep.subr.mxu0 0.0
        %1801 = vmatpush1.msra.mxu0 0.0
        %1802 = vmatprep.subr.mxu0 0.0
        %1803 = vmatpush1.msra.mxu0 0.0
        %1804 = vmatprep.subr.mxu0 0.0
        %1805 = vmatpush1.msra.mxu0 0.0
        %1806 = vmatprep.subr.mxu0 0.0
        %1807 = vmatpush1.msra.mxu0 0.0
        %1808 = vmatprep.subr.mxu0 0.0
        %1809 = vmatpush1.msra.mxu0 %v1777
        %1810 = vmatprep.subr.mxu0 0.0
        %1811 = vmatpush1.msra.mxu0 %v1776
        %1812 = vmatprep.subr.mxu0 0.0
        %1813 = vmatpush1.msra.mxu0 %v1775
        %1814 = vmatprep.subr.mxu0 0.0
        %1815 = vmatpush1.msra.mxu0 %v1774
        %1816 = vmatprep.subr.mxu0 0.0
        %1817 = vmatpush1.msra.mxu0 %v1773
        %1818 = vmatprep.subr.mxu0 0.0
        %1819 = vmatpush1.msra.mxu0 %v1772
        %1820 = vmatprep.subr.mxu0 0.0
        %1821 = vmatpush1.msra.mxu0 %v1771
        %1822 = vmatprep.subr.mxu0 0.0
        %1823 = vmatpush1.msra.mxu0 %v1770
        %1824 = vmatprep.subr.mxu0 0.0
        %1825 = vmatpush2.msra.mxu0 0.0
        %1826 = vmatprep.subr.mxu0 0.0
        %1827 = vmatpush2.msra.mxu0 0.0
        %1828 = vmatprep.subr.mxu0 0.0
        %1829 = vmatpush2.msra.mxu0 0.0
        %1830 = vmatprep.subr.mxu0 0.0
        %1831 = vmatpush2.msra.mxu0 0.0
        %1832 = vmatprep.subr.mxu0 0.0
        %1833 = vmatpush2.msra.mxu0 0.0
        %1834 = vmatprep.subr.mxu0 0.0
        %1835 = vmatpush2.msra.mxu0 0.0
        %1836 = vmatprep.subr.mxu0 0.0
        %1837 = vmatpush2.msra.mxu0 0.0
        %1838 = vmatprep.subr.mxu0 0.0
        %1839 = vmatpush2.msra.mxu0 0.0
        %1840 = vmatprep.subr.mxu0 0.0
        %1841 = vmatpush2.msra.mxu0 0.0
        %1842 = vmatprep.subr.mxu0 0.0
        %1843 = vmatpush2.msra.mxu0 0.0
        %1844 = vmatprep.subr.mxu0 0.0
        %1845 = vmatpush2.msra.mxu0 0.0
        %1846 = vmatprep.subr.mxu0 0.0
        %1847 = vmatpush2.msra.mxu0 0.0
        %1848 = vmatprep.subr.mxu0 0.0
        %1849 = vmatpush2.msra.mxu0 0.0
        %1850 = vmatprep.subr.mxu0 0.0
        %1851 = vmatpush2.msra.mxu0 0.0
        %1852 = vmatprep.subr.mxu0 0.0
        %1853 = vmatpush2.msra.mxu0 0.0
        %1854 = vmatprep.subr.mxu0 0.0
        %1855 = vmatpush2.msra.mxu0 0.0
        %1856 = vmatprep.mubr.f32.mxu0 0.0
        %1857 = vmatmul.mubr.f32.gmra.mxu0 %v1788
        %v1858 = vpop.f32.mrf.mxu0
        %v1859 = vadd.f32 0.0, %v1858
        %v1860 = vpop.f32.mrf.mxu0
        %1861 = vmatprep.mubr.f32.mxu0 0.0
        %1862 = vmatmul.mubr.f32.gmra.mxu0 %v1790
        %v1863 = vpop.f32.mrf.mxu0
        %v1864 = vadd.f32 0.0, %v1863
        %v1865 = vpop.f32.mrf.mxu0
        %1866 = vdwg.mxu0
        %v1867 = vadd.f32 %v1767, %v1859
        %v1868 = vadd.f32 %v1768, %v1864
        %v1869 = vld [vmem:[#allocation2 + $0x40] sm:$0xff]
        %s1870 = scalar_lea.vmem [#allocation8], 832
        %v1871 = vld [vmem:[%s1870] sm:$0xff]
        %v1872 = vld [vmem:[%s1870 + $0x8] sm:$0xff]
        %v1873 = vld [vmem:[%s1870 + $0x10] sm:$0xff]
        %v1874 = vld [vmem:[%s1870 + $0x18] sm:$0xff]
        %v1875 = vld [vmem:[%s1870 + $0x20] sm:$0xff]
        %v1876 = vld [vmem:[%s1870 + $0x28] sm:$0xff]
        %v1877 = vld [vmem:[%s1870 + $0x30] sm:$0xff]
        %v1878 = vld [vmem:[%s1870 + $0x38] sm:$0xff]
        %v1879 = vsel %vm297, %v1062, 0
        %v1882 = vsel %vm297, %v1869, 0
        %1884 = vmatprep.subr.mxu0 0.0
        %1885 = vmatpush1.msra.mxu0 0.0
        %1886 = vmatprep.subr.mxu0 0.0
        %1887 = vmatpush1.msra.mxu0 0.0
        %1888 = vmatprep.subr.mxu0 0.0
        %1889 = vmatpush1.msra.mxu0 0.0
        %1890 = vmatprep.subr.mxu0 0.0
        %1891 = vmatpush1.msra.mxu0 0.0
        %1892 = vmatprep.subr.mxu0 0.0
        %1893 = vmatpush1.msra.mxu0 0.0
        %1894 = vmatprep.subr.mxu0 0.0
        %1895 = vmatpush1.msra.mxu0 0.0
        %1896 = vmatprep.subr.mxu0 0.0
        %1897 = vmatpush1.msra.mxu0 0.0
        %1898 = vmatprep.subr.mxu0 0.0
        %1899 = vmatpush1.msra.mxu0 0.0
        %1900 = vmatprep.subr.mxu0 0.0
        %1901 = vmatpush1.msra.mxu0 %v1878
        %1902 = vmatprep.subr.mxu0 0.0
        %1903 = vmatpush1.msra.mxu0 %v1877
        %1904 = vmatprep.subr.mxu0 0.0
        %1905 = vmatpush1.msra.mxu0 %v1876
        %1906 = vmatprep.subr.mxu0 0.0
        %1907 = vmatpush1.msra.mxu0 %v1875
        %1908 = vmatprep.subr.mxu0 0.0
        %1909 = vmatpush1.msra.mxu0 %v1874
        %1910 = vmatprep.subr.mxu0 0.0
        %1911 = vmatpush1.msra.mxu0 %v1873
        %1912 = vmatprep.subr.mxu0 0.0
        %1913 = vmatpush1.msra.mxu0 %v1872
        %1914 = vmatprep.subr.mxu0 0.0
        %1915 = vmatpush1.msra.mxu0 %v1871
        %1916 = vmatprep.subr.mxu0 0.0
        %1917 = vmatpush2.msra.mxu0 0.0
        %1918 = vmatprep.subr.mxu0 0.0
        %1919 = vmatpush2.msra.mxu0 0.0
        %1920 = vmatprep.subr.mxu0 0.0
        %1921 = vmatpush2.msra.mxu0 0.0
        %1922 = vmatprep.subr.mxu0 0.0
        %1923 = vmatpush2.msra.mxu0 0.0
        %1924 = vmatprep.subr.mxu0 0.0
        %1925 = vmatpush2.msra.mxu0 0.0
        %1926 = vmatprep.subr.mxu0 0.0
        %1927 = vmatpush2.msra.mxu0 0.0
        %1928 = vmatprep.subr.mxu0 0.0
        %1929 = vmatpush2.msra.mxu0 0.0
        %1930 = vmatprep.subr.mxu0 0.0
        %1931 = vmatpush2.msra.mxu0 0.0
        %1932 = vmatprep.subr.mxu0 0.0
        %1933 = vmatpush2.msra.mxu0 0.0
        %1934 = vmatprep.subr.mxu0 0.0
        %1935 = vmatpush2.msra.mxu0 0.0
        %1936 = vmatprep.subr.mxu0 0.0
        %1937 = vmatpush2.msra.mxu0 0.0
        %1938 = vmatprep.subr.mxu0 0.0
        %1939 = vmatpush2.msra.mxu0 0.0
        %1940 = vmatprep.subr.mxu0 0.0
        %1941 = vmatpush2.msra.mxu0 0.0
        %1942 = vmatprep.subr.mxu0 0.0
        %1943 = vmatpush2.msra.mxu0 0.0
        %1944 = vmatprep.subr.mxu0 0.0
        %1945 = vmatpush2.msra.mxu0 0.0
        %1946 = vmatprep.subr.mxu0 0.0
        %1947 = vmatpush2.msra.mxu0 0.0
        %1948 = vmatprep.mubr.f32.mxu0 0.0
        %1949 = vmatmul.mubr.f32.gmra.mxu0 %v1879
        %v1950 = vpop.f32.mrf.mxu0
        %v1951 = vadd.f32 0.0, %v1950
        %v1952 = vpop.f32.mrf.mxu0
        %1953 = vmatprep.mubr.f32.mxu0 0.0
        %1954 = vmatmul.mubr.f32.gmra.mxu0 %v1882
        %v1955 = vpop.f32.mrf.mxu0
        %v1956 = vadd.f32 0.0, %v1955
        %v1957 = vpop.f32.mrf.mxu0
        %1958 = vdwg.mxu0
        %v1959 = vadd.f32 %v1867, %v1951
        %v1960 = vadd.f32 %v1868, %v1956
        %s1961 = scalar_lea.vmem [#allocation8], 896
        %v1962 = vld [vmem:[%s1961] sm:$0xff]
        %v1963 = vld [vmem:[%s1961 + $0x8] sm:$0xff]
        %v1964 = vld [vmem:[%s1961 + $0x10] sm:$0xff]
        %v1965 = vld [vmem:[%s1961 + $0x18] sm:$0xff]
        %v1966 = vld [vmem:[%s1961 + $0x20] sm:$0xff]
        %v1967 = vld [vmem:[%s1961 + $0x28] sm:$0xff]
        %v1968 = vld [vmem:[%s1961 + $0x30] sm:$0xff]
        %v1969 = vld [vmem:[%s1961 + $0x38] sm:$0xff]
        %1970 = vrot.lane.b32.xlu0 %v1062, 80
        %v1971 = vpop.permute.xlu0 %1970
        %1972 = vrot.lane.b32.xlu0 %v1869, 80
        %v1973 = vpop.permute.xlu0 %1972
        %v1974 = vsel %vm297, %v1971, 0
        %v1976 = vsel %vm297, %v1973, 0
        %1978 = vmatprep.subr.mxu0 0.0
        %1979 = vmatpush1.msra.mxu0 0.0
        %1980 = vmatprep.subr.mxu0 0.0
        %1981 = vmatpush1.msra.mxu0 0.0
        %1982 = vmatprep.subr.mxu0 0.0
        %1983 = vmatpush1.msra.mxu0 0.0
        %1984 = vmatprep.subr.mxu0 0.0
        %1985 = vmatpush1.msra.mxu0 0.0
        %1986 = vmatprep.subr.mxu0 0.0
        %1987 = vmatpush1.msra.mxu0 0.0
        %1988 = vmatprep.subr.mxu0 0.0
        %1989 = vmatpush1.msra.mxu0 0.0
        %1990 = vmatprep.subr.mxu0 0.0
        %1991 = vmatpush1.msra.mxu0 0.0
        %1992 = vmatprep.subr.mxu0 0.0
        %1993 = vmatpush1.msra.mxu0 0.0
        %1994 = vmatprep.subr.mxu0 0.0
        %1995 = vmatpush1.msra.mxu0 %v1969
        %1996 = vmatprep.subr.mxu0 0.0
        %1997 = vmatpush1.msra.mxu0 %v1968
        %1998 = vmatprep.subr.mxu0 0.0
        %1999 = vmatpush1.msra.mxu0 %v1967
        %2000 = vmatprep.subr.mxu0 0.0
        %2001 = vmatpush1.msra.mxu0 %v1966
        %2002 = vmatprep.subr.mxu0 0.0
        %2003 = vmatpush1.msra.mxu0 %v1965
        %2004 = vmatprep.subr.mxu0 0.0
        %2005 = vmatpush1.msra.mxu0 %v1964
        %2006 = vmatprep.subr.mxu0 0.0
        %2007 = vmatpush1.msra.mxu0 %v1963
        %2008 = vmatprep.subr.mxu0 0.0
        %2009 = vmatpush1.msra.mxu0 %v1962
        %2010 = vmatprep.subr.mxu0 0.0
        %2011 = vmatpush2.msra.mxu0 0.0
        %2012 = vmatprep.subr.mxu0 0.0
        %2013 = vmatpush2.msra.mxu0 0.0
        %2014 = vmatprep.subr.mxu0 0.0
        %2015 = vmatpush2.msra.mxu0 0.0
        %2016 = vmatprep.subr.mxu0 0.0
        %2017 = vmatpush2.msra.mxu0 0.0
        %2018 = vmatprep.subr.mxu0 0.0
        %2019 = vmatpush2.msra.mxu0 0.0
        %2020 = vmatprep.subr.mxu0 0.0
        %2021 = vmatpush2.msra.mxu0 0.0
        %2022 = vmatprep.subr.mxu0 0.0
        %2023 = vmatpush2.msra.mxu0 0.0
        %2024 = vmatprep.subr.mxu0 0.0
        %2025 = vmatpush2.msra.mxu0 0.0
        %2026 = vmatprep.subr.mxu0 0.0
        %2027 = vmatpush2.msra.mxu0 0.0
        %2028 = vmatprep.subr.mxu0 0.0
        %2029 = vmatpush2.msra.mxu0 0.0
        %2030 = vmatprep.subr.mxu0 0.0
        %2031 = vmatpush2.msra.mxu0 0.0
        %2032 = vmatprep.subr.mxu0 0.0
        %2033 = vmatpush2.msra.mxu0 0.0
        %2034 = vmatprep.subr.mxu0 0.0
        %2035 = vmatpush2.msra.mxu0 0.0
        %2036 = vmatprep.subr.mxu0 0.0
        %2037 = vmatpush2.msra.mxu0 0.0
        %2038 = vmatprep.subr.mxu0 0.0
        %2039 = vmatpush2.msra.mxu0 0.0
        %2040 = vmatprep.subr.mxu0 0.0
        %2041 = vmatpush2.msra.mxu0 0.0
        %2042 = vmatprep.mubr.f32.mxu0 0.0
        %2043 = vmatmul.mubr.f32.gmra.mxu0 %v1974
        %v2044 = vpop.f32.mrf.mxu0
        %v2045 = vadd.f32 0.0, %v2044
        %v2046 = vpop.f32.mrf.mxu0
        %2047 = vmatprep.mubr.f32.mxu0 0.0
        %2048 = vmatmul.mubr.f32.gmra.mxu0 %v1976
        %v2049 = vpop.f32.mrf.mxu0
        %v2050 = vadd.f32 0.0, %v2049
        %v2051 = vpop.f32.mrf.mxu0
        %2052 = vdwg.mxu0
        %v2053 = vadd.f32 %v1959, %v2045
        %v2054 = vadd.f32 %v1960, %v2050
        %v2055 = vld [vmem:[#allocation2 + $0x40] sm:$0xff]
        %v2056 = vld [vmem:[#allocation2 + $0x48] sm:$0xff]
        %s2057 = scalar_lea.vmem [#allocation8], 960
        %v2058 = vld [vmem:[%s2057] sm:$0xff]
        %v2059 = vld [vmem:[%s2057 + $0x8] sm:$0xff]
        %v2060 = vld [vmem:[%s2057 + $0x10] sm:$0xff]
        %v2061 = vld [vmem:[%s2057 + $0x18] sm:$0xff]
        %v2062 = vld [vmem:[%s2057 + $0x20] sm:$0xff]
        %v2063 = vld [vmem:[%s2057 + $0x28] sm:$0xff]
        %v2064 = vld [vmem:[%s2057 + $0x30] sm:$0xff]
        %v2065 = vld [vmem:[%s2057 + $0x38] sm:$0xff]
        %2068 = vrot.lane.b32.xlu0 %v1263, 32
        %v2069 = vpop.permute.xlu0 %2068
        %2070 = vrot.lane.b32.xlu0 %v1264, 32
        %v2071 = vpop.permute.xlu0 %2070
        %2072 = vrot.lane.b32.xlu0 %v2055, 32
        %v2073 = vpop.permute.xlu0 %2072
        %2074 = vrot.lane.b32.xlu0 %v2056, 32
        %v2075 = vpop.permute.xlu0 %2074
        %v2076 = vsel %vm483, %v2069, %v2071
        %v2077 = vsel %vm483, %v2073, %v2075
        %v2078 = vsel %vm297, %v2076, 0
        %v2080 = vsel %vm297, %v2077, 0
        %2082 = vmatprep.subr.mxu0 0.0
        %2083 = vmatpush1.msra.mxu0 0.0
        %2084 = vmatprep.subr.mxu0 0.0
        %2085 = vmatpush1.msra.mxu0 0.0
        %2086 = vmatprep.subr.mxu0 0.0
        %2087 = vmatpush1.msra.mxu0 0.0
        %2088 = vmatprep.subr.mxu0 0.0
        %2089 = vmatpush1.msra.mxu0 0.0
        %2090 = vmatprep.subr.mxu0 0.0
        %2091 = vmatpush1.msra.mxu0 0.0
        %2092 = vmatprep.subr.mxu0 0.0
        %2093 = vmatpush1.msra.mxu0 0.0
        %2094 = vmatprep.subr.mxu0 0.0
        %2095 = vmatpush1.msra.mxu0 0.0
        %2096 = vmatprep.subr.mxu0 0.0
        %2097 = vmatpush1.msra.mxu0 0.0
        %2098 = vmatprep.subr.mxu0 0.0
        %2099 = vmatpush1.msra.mxu0 %v2065
        %2100 = vmatprep.subr.mxu0 0.0
        %2101 = vmatpush1.msra.mxu0 %v2064
        %2102 = vmatprep.subr.mxu0 0.0
        %2103 = vmatpush1.msra.mxu0 %v2063
        %2104 = vmatprep.subr.mxu0 0.0
        %2105 = vmatpush1.msra.mxu0 %v2062
        %2106 = vmatprep.subr.mxu0 0.0
        %2107 = vmatpush1.msra.mxu0 %v2061
        %2108 = vmatprep.subr.mxu0 0.0
        %2109 = vmatpush1.msra.mxu0 %v2060
        %2110 = vmatprep.subr.mxu0 0.0
        %2111 = vmatpush1.msra.mxu0 %v2059
        %2112 = vmatprep.subr.mxu0 0.0
        %2113 = vmatpush1.msra.mxu0 %v2058
        %2114 = vmatprep.subr.mxu0 0.0
        %2115 = vmatpush2.msra.mxu0 0.0
        %2116 = vmatprep.subr.mxu0 0.0
        %2117 = vmatpush2.msra.mxu0 0.0
        %2118 = vmatprep.subr.mxu0 0.0
        %2119 = vmatpush2.msra.mxu0 0.0
        %2120 = vmatprep.subr.mxu0 0.0
        %2121 = vmatpush2.msra.mxu0 0.0
        %2122 = vmatprep.subr.mxu0 0.0
        %2123 = vmatpush2.msra.mxu0 0.0
        %2124 = vmatprep.subr.mxu0 0.0
        %2125 = vmatpush2.msra.mxu0 0.0
        %2126 = vmatprep.subr.mxu0 0.0
        %2127 = vmatpush2.msra.mxu0 0.0
        %2128 = vmatprep.subr.mxu0 0.0
        %2129 = vmatpush2.msra.mxu0 0.0
        %2130 = vmatprep.subr.mxu0 0.0
        %2131 = vmatpush2.msra.mxu0 0.0
        %2132 = vmatprep.subr.mxu0 0.0
        %2133 = vmatpush2.msra.mxu0 0.0
        %2134 = vmatprep.subr.mxu0 0.0
        %2135 = vmatpush2.msra.mxu0 0.0
        %2136 = vmatprep.subr.mxu0 0.0
        %2137 = vmatpush2.msra.mxu0 0.0
        %2138 = vmatprep.subr.mxu0 0.0
        %2139 = vmatpush2.msra.mxu0 0.0
        %2140 = vmatprep.subr.mxu0 0.0
        %2141 = vmatpush2.msra.mxu0 0.0
        %2142 = vmatprep.subr.mxu0 0.0
        %2143 = vmatpush2.msra.mxu0 0.0
        %2144 = vmatprep.subr.mxu0 0.0
        %2145 = vmatpush2.msra.mxu0 0.0
        %2146 = vmatprep.mubr.f32.mxu0 0.0
        %2147 = vmatmul.mubr.f32.gmra.mxu0 %v2078
        %v2148 = vpop.f32.mrf.mxu0
        %v2149 = vadd.f32 0.0, %v2148
        %v2150 = vpop.f32.mrf.mxu0
        %2151 = vmatprep.mubr.f32.mxu0 0.0
        %2152 = vmatmul.mubr.f32.gmra.mxu0 %v2080
        %v2153 = vpop.f32.mrf.mxu0
        %v2154 = vadd.f32 0.0, %v2153
        %v2155 = vpop.f32.mrf.mxu0
        %2156 = vdwg.mxu0
        %v2157 = vadd.f32 %v2053, %v2149
        %v2158 = vadd.f32 %v2054, %v2154
        %2159 = vst.msk [vmem:[%s286] sm:$0xff] %vm297, %v2157
        %2160 = vst.msk [vmem:[%s286 + $0x8] sm:$0xff] %vm297, %v2158
        %s2161 = sand.u32 %s142, 1
        %s2162 = scalar_lea.sflag [#allocation5], %s2161
        %s2163 = sand.u32 %s142, 1
        %s2164 = smul.addr %s2163, 16
        %s2165 = scalar_lea.vmem [#allocation11], %s2164
        // Predicated region
        $region57: #{tpu_custom_call.1} parent=39 // pred_check
          %p2166 = pneg %p152
        $region58: #{tpu_custom_call.1} parent=39 // pred_check_branch
          %2168 = sbr.rel (%p2166) target = $region60
        $region59: #{tpu_custom_call.1} parent=39 // pred_region
          %s2170 = ssub.s32 256, 256
          %2171 = vsyncadd %s2162, %s2170
          %s2172 = smul.addr %s24, 2
          %s2173 = smul.addr %s2172, 128
          %s2174 = scalar_lea.hbm %s5, %s2173
          %s2175 = sshll.u32 %s2165, 4
          %s2176 = int_to_ptr.vmem [resolvable:$true] %s2175
          %2181 = dma.vmem_to_hbm [thread:$0]  %s2176, 256, %s2174, %s2162, 128, 128, 8
        $region60: #{tpu_custom_call.1} parent=39 // pred_fallthru
          _
      $region40: #{tpu_custom_call.1} parent=5 // pred_fallthru
        _
      %p2182 = scmp.le.s32.totalorder 2, %s19
      // Predicated region
      $region61: #{tpu_custom_call.1} parent=5 // pred_check
        %p2183 = pneg %p2182
      $region62: #{tpu_custom_call.1} parent=5 // pred_check_branch
        %2185 = sbr.rel (%p2183) target = $region64
      $region63: #{tpu_custom_call.1} parent=5 // pred_region
        %s2186 = ssub.s32 %s19, 2
        // Predicated region
        $region65: #{tpu_custom_call.1} parent=63 // pred_check
          %p2187 = pneg %p158
        $region66: #{tpu_custom_call.1} parent=63 // pred_check_branch
          %2189 = sbr.rel (%p2187) target = $region68
        $region67: #{tpu_custom_call.1} parent=63 // pred_region
          %s2190 = sand.u32 %s143, 1
          %s2191 = scalar_lea.sflag [#allocation5], %s2190
          %s2192 = sand.u32 %s143, 1
          %s2193 = smul.addr %s2192, 16
          %s2194 = scalar_lea.vmem [#allocation11], %s2193
          %2195 = dma.done %s2191, 256
        $region68: #{tpu_custom_call.1} parent=63 // pred_fallthru
          _
      $region64: #{tpu_custom_call.1} parent=5 // pred_fallthru
        _
    $region6: #{tpu_custom_call.1} parent=1 // loop_footer
      %s23 = sadd.s32 1, %s19
    $region7: #{tpu_custom_call.1} parent=1 // loop_footer_branch
      %18 = sbr.rel target = $region3
    $region8: #{tpu_custom_call.1} parent=1 // loop_exit
      _
    %2196 = vsyncpa [#allocation4], 1
    %s2197 = scalar_lea.sflag [#allocation4], 1
    %2198 = vsyncpa %s2197, 1
    %2199 = vsyncpa [#allocation7], 1
    %2200 = vsyncpa [#allocation10], 1
    %2201 = vsyncpa [#allocation5], 1
    %s2202 = scalar_lea.sflag [#allocation5], 1
    %2203 = vsyncpa %s2202, 1

</llo_original>
